<compile_context>
chip_gen: v5e
topology: v5e:2x2
jax: 0.10.0
libtpu: 0.0.40
codegen_flags: <defaults>
</compile_context>

<pallas_src>
import math
import functools

import numpy as np
import jax
import jax.numpy as jnp
from jax.experimental import pallas as pl
from jax.experimental.pallas import tpu as pltpu

U_GROUP = 2
TEMPERATURE = 0.67
PRIOR_VAR = 1.0
EPS = 1e-8


# --------------------------------------------------------------------------------------
# in-kernel math helpers
# --------------------------------------------------------------------------------------
def _sigmoid_stable(x):
    z = jnp.exp(-jnp.abs(x))
    return jnp.where(x >= 0, 1.0 / (1.0 + z), z / (1.0 + z))


def _half_swap(a, k_half):
    # Partner of column c under the prep-time LWTA layout (member u of group k lives in
    # column u*K + k) is column (c + K) mod 2K, i.e. swap the two lane halves.
    return jnp.concatenate([a[:, k_half:], a[:, :k_half]], axis=1)


def _sample_gaussian_and_kl(mu, rho, eps, log_pv, inv_2pv2):
    """sigma = softplus(rho); w = mu + softplus(sigma, beta=10, thr=20) * eps;
    returns (w, sum KL(N(mu,sigma) || N(0, prior_var)), exp(rho)).
    exp(rho) is computed once; exp(10*sigma) == (1+exp(rho))**10 built with multiplies."""
    e = jnp.exp(rho)
    sig = jnp.log(1.0 + e)                       # torch.log1p(torch.exp(rho))
    p2 = (1.0 + e) * (1.0 + e)
    p4 = p2 * p2
    p10 = p4 * p4 * p2                           # == exp(10*sig)
    sp10 = jnp.where(10.0 * sig > 20.0, sig, jnp.log(1.0 + p10) / 10.0)
    sampled = mu + sp10 * eps
    kl = jnp.sum(log_pv - jnp.log(sig) + (sig * sig + mu * mu) * inv_2pv2 - 0.5)
    return sampled, kl, e


# --------------------------------------------------------------------------------------
# fused forward kernel
# --------------------------------------------------------------------------------------
def _fused_forward_kernel(xt_ref, gu_ref, *refs, dims, h_last, u_size, temp, prior_var):
    n_blocks = len(dims)
    blk_refs = refs[:n_blocks]
    pred_ref = refs[n_blocks]
    negout_ref = refs[n_blocks + 1]
    scal_ref = refs[n_blocks + 2]          # SMEM (2,): [kl_total, ib]

    din0 = dims[0][0]
    h = xt_ref[:, 0:din0]                  # (B, Din0)
    tau = xt_ref[:, din0:din0 + 1]         # (B, 1)
    batch = h.shape[0]

    log_p = math.log(1.0 / u_size)
    log_pv = math.log(prior_var)
    inv_2pv2 = 1.0 / (2.0 * prior_var * prior_var)

    kl_total = jnp.float32(0.0)
    gu_off = 0
    last_in = h
    mu_out = None
    e_last = None
    din_l, hdim_l = dims[-1]

    for i, (din, hdim) in enumerate(dims):
        pr = blk_refs[i]
        mu = pr[0:din + 1, 0:hdim]                     # weight rows + bias row
        rho = pr[0:din + 1, hdim:2 * hdim]
        eps = pr[0:din + 1, 2 * hdim:3 * hdim]

        sampled, kl_blk, e = _sample_gaussian_and_kl(mu, rho, eps, log_pv, inv_2pv2)
        kl_total = kl_total + kl_blk                   # weight + bias KL in one reduce

        last_in = h
        if i == n_blocks - 1:
            # One MXU push gives both the pre-activation and the IB mean mu_out.
            rhs = jnp.concatenate([sampled, mu], axis=1)                 # (Din+1, 2H)
            res = (jnp.dot(h, rhs[0:din, :], preferred_element_type=jnp.float32)
                   + rhs[din:din + 1, :])                                # + [b | bmu]
            pre = res[:, 0:hdim]
            mu_out = res[:, hdim:2 * hdim]
            e_last = e
        else:
            pre = (jnp.dot(h, sampled[0:din, :], preferred_element_type=jnp.float32)
                   + sampled[din:din + 1, :])

        # LWTA (U=2): pairwise softmax == sigmoid of the difference with the partner.
        k_half = hdim // u_size
        gu = gu_ref[:, gu_off:gu_off + hdim]
        gu_off += hdim
        gum = -jnp.log(-jnp.log(gu + EPS) + EPS)       # Gumbel noise
        t = (pre + gum) / temp
        xi = _sigmoid_stable(t - _half_swap(t, k_half))
        q = _sigmoid_stable(pre - _half_swap(pre, k_half))
        kl_total = kl_total + (jnp.sum(q * (jnp.log(q + EPS) - log_p))
                               / float(batch * u_size * 1000))
        h = pre * xi

    # ---- information-bottleneck KL of last block's linear (reuses exp(rho)) ----
    e_sq = e_last * e_last
    var_out = (jnp.dot(last_in * last_in, e_sq[0:din_l, :],
                       preferred_element_type=jnp.float32)
               + e_sq[din_l:din_l + 1, :])
    # -log(sqrt(var)) == -0.5*log(var)
    ib = jnp.mean(-0.5 * jnp.log(var_out) + 0.5 * (var_out + mu_out * mu_out) - 0.5)

    # ---- predictor: BayesianLinearPositive with out_dim == 1 -> VPU mul + lane reduce.
    #      Packed row layout: [w_h (Hlast) | w_tau | bias] for mu / rho / eps rows. ----
    pmu, prho, peps = pred_ref[0:1, :], pred_ref[1:2, :], pred_ref[2:3, :]
    pw, kl_pred, _ = _sample_gaussian_and_kl(pmu, prho, peps, log_pv, inv_2pv2)
    kl_total = kl_total + kl_pred
    pw_sq = pw * pw
    out = (jnp.sum(h * pw_sq[:, 0:h_last], axis=1, keepdims=True)
           + tau * pw_sq[:, h_last:h_last + 1]
           + pw_sq[:, h_last + 1:h_last + 2])                            # (B, 1)
    negout_ref[...] = (-(tau * _sigmoid_stable(out))).astype(negout_ref.dtype)

    scal_ref[0] = kl_total
    scal_ref[1] = ib


# --------------------------------------------------------------------------------------
# layout preparation (wrapper-side packing; noise changes per forward, so it is repacked)
# --------------------------------------------------------------------------------------
def prepare_pallas_inputs(params, noise, u_size=U_GROUP):
    """Pack each block's (wmu|wrho|weps [+bias row]) into one lane-dense (Din+1, 3H)
    slab, all Gumbel uniforms into one (B, sum(H)) array, and the predictor into one
    (3, Hlast+2) slab.  Hidden columns are reordered so the two LWTA members of each
    group sit H//2 lanes apart; the next layer's rows (and the predictor's h-rows) are
    permuted consistently, so nothing is un-permuted inside the kernel."""
    assert u_size == 2, "fused kernel implements the default U=2 LWTA grouping"
    blocks_packed, gu_cols = [], []
    prev_perm = None
    for p, n in zip(params["blocks"], noise["blocks"]):
        hdim = p["wmu"].shape[0]
        perm = np.concatenate([np.arange(0, hdim, 2), np.arange(1, hdim, 2)])

        def tw(w):                                     # (H, Din) -> (Din, H), permuted
            wt = jnp.asarray(w).T
            if prev_perm is not None:
                wt = wt[prev_perm, :]
            return wt[:, perm]

        def tb(b):                                     # (H,) -> (1, H), permuted
            return jnp.asarray(b)[perm][None, :]

        mu_s = jnp.concatenate([tw(p["wmu"]), tb(p["bmu"])], axis=0)       # (Din+1, H)
        rho_s = jnp.concatenate([tw(p["wrho"]), tb(p["brho"])], axis=0)
        eps_s = jnp.concatenate([tw(n["weps"]), tb(n["beps"])], axis=0)
        blocks_packed.append(jnp.concatenate([mu_s, rho_s, eps_s], axis=1))  # (Din+1, 3H)
        gu_cols.append(jnp.asarray(n["gu"])[:, perm])
        prev_perm = perm

    gu_all = jnp.concatenate(gu_cols, axis=1)          # (B, sum(H))

    pp, pn = params["pred"], noise["pred"]
    out_dim, dlast1 = pp["wmu"].shape
    assert out_dim == 1, "packed predictor layout assumes output_dim == 1"
    # TODO(synk): out_dim > 1 would need a (Hlast, O)-shaped predictor weight + matmul.
    hlast = dlast1 - 1
    last_perm = prev_perm if prev_perm is not None else np.arange(hlast)

    def prow(w, b):                    # -> (1, Hlast+2): [w_h (permuted) | w_tau | bias]
        w = jnp.asarray(w)
        return jnp.concatenate([w[:, :hlast][:, last_perm],
                                w[:, hlast:hlast + 1],
                                jnp.asarray(b)[None, :]], axis=1)

    pred_packed = jnp.concatenate([prow(pp["wmu"], pp["bmu"]),
                                   prow(pp["wrho"], pp["brho"]),
                                   prow(pn["weps"], pn["beps"])], axis=0)   # (3, Hlast+2)
    return blocks_packed, gu_all, pred_packed


# --------------------------------------------------------------------------------------
# wrapper: single fused pallas_call
# --------------------------------------------------------------------------------------
def forward_pallas(params, x, horizon, noise, *, u_size=U_GROUP, temp=TEMPERATURE,
                   prior_var=PRIOR_VAR):
    blocks_packed, gu_all, pred_packed = prepare_pallas_inputs(params, noise, u_size=u_size)
    dims = tuple((int(p["wmu"].shape[1]), int(p["wmu"].shape[0])) for p in params["blocks"])
    h_last = dims[-1][1]
    out_dim = int(params["pred"]["wmu"].shape[0])
    batch = x.shape[0]

    tau = horizon[:, None].astype(jnp.float32)
    xtau = jnp.concatenate([x.astype(jnp.float32), tau], axis=1)     # (B, Din0 + 1)

    args = [xtau, gu_all] + list(blocks_packed) + [pred_packed]
    kernel = functools.partial(_fused_forward_kernel, dims=dims, h_last=h_last,
                               u_size=u_size, temp=temp, prior_var=prior_var)
    vmem = pl.BlockSpec(memory_space=pltpu.MemorySpace.VMEM)
    smem = pl.BlockSpec(memory_space=pltpu.MemorySpace.SMEM)
    negout, scal = pl.pallas_call(
        kernel,
        out_shape=(jax.ShapeDtypeStruct((batch, out_dim), jnp.float32),
                   jax.ShapeDtypeStruct((2,), jnp.float32)),
        in_specs=[vmem] * len(args),
        out_specs=(vmem, smem),
    )(*args)
    # TODO(synk): at non-trivial batch sizes add grid=(pl.cdiv(B, TILE_B),) with
    #   dimension_semantics=("parallel",) (weight slabs pinned to block 0) so v7x's
    #   second TensorCore is used and batch DMAs pipeline behind compute; budget the
    #   resident weights against v7x's 64 MiB VMEM.
    # TODO(synk): production variant should draw weps/beps/gu in-kernel via
    #   pltpu.prng_seed + pltpu.prng_random_bits to cut weight-stream HBM bytes by ~1/3;
    #   kept as inputs here so the pure-JAX reference sees identical noise.
    # TODO(synk): the PyTorch `gradient` method (autograd w.r.t. horizon with clamp_) is
    #   a training-time utility, not part of the forward pass; not implemented here.
    return negout, tau, scal[0], scal[1]


# --------------------------------------------------------------------------------------
# deterministic parameter / noise construction (mirrors module __init__ shapes)
# --------------------------------------------------------------------------------------
def init_params(key, input_dim, layers, output_dim=1):
    blocks = []
    prev = input_dim
    for hdim in layers:
        key, k1, k2 = jax.random.split(key, 3)
        bound = 1.0 / math.sqrt(prev)     # kaiming_uniform(a=sqrt(5)) bound
        blocks.append(dict(
            wmu=jax.random.uniform(k1, (hdim, prev), jnp.float32, -bound, bound),
            bmu=jax.random.uniform(k2, (hdim,), jnp.float32, -bound, bound),
            wrho=jnp.full((hdim, prev), -5.0, jnp.float32),
            brho=jnp.full((hdim,), -5.0, jnp.float32),
        ))
        prev = hdim
    key, k1, k2 = jax.random.split(key, 3)
    bound = 1.0 / math.sqrt(prev + 1)
    pred = dict(
        wmu=jax.random.uniform(k1, (output_dim, prev + 1), jnp.float32, -bound, bound),
        bmu=jax.random.uniform(k2, (output_dim,), jnp.float32, -bound, bound),
        wrho=jnp.full((output_dim, prev + 1), -5.0, jnp.float32),
        brho=jnp.full((output_dim,), -5.0, jnp.float32),
    )
    return dict(blocks=blocks, pred=pred)


def sample_noise(key, params, batch, u_size=U_GROUP):
    blocks = []
    for p in params["blocks"]:
        hdim, prev = p["wmu"].shape
        key, kw, kb, kg = jax.random.split(key, 4)
        blocks.append(dict(
            weps=jax.random.normal(kw, (hdim, prev), jnp.float32),
            beps=jax.random.normal(kb, (hdim,), jnp.float32),
            gu=jax.random.uniform(kg, (batch, hdim), jnp.float32),   # flat (B, H)
        ))
    pp = params["pred"]
    key, kw, kb = jax.random.split(key, 3)
    pred = dict(
        weps=jax.random.normal(kw, pp["wmu"].shape, jnp.float32),
        beps=jax.random.normal(kb, pp["bmu"].shape, jnp.float32),
    )
    return dict(blocks=blocks, pred=pred)


# --------------------------------------------------------------------------------------
# pure-JAX reference (mirrors the PyTorch code line-for-line) for a correctness check
# --------------------------------------------------------------------------------------
def _softplus1_ref(x):
    return jnp.log(1.0 + jnp.exp(x))


def _softplus_beta10_ref(x):
    return jnp.where(10.0 * x > 20.0, x, jnp.log(1.0 + jnp.exp(10.0 * x)) / 10.0)


def _kl_normal_ref(mu, sigma, prior_var):
    pv = jnp.float32(prior_var)
    return (jnp.log(pv) - jnp.log(sigma)
            + (sigma * sigma + mu * mu) / (2.0 * pv * pv) - 0.5)


def forward_ref(params, x, horizon, noise, *, u_size=U_GROUP, temp=TEMPERATURE,
                prior_var=PRIOR_VAR):
    kl_total = jnp.float32(0.0)
    h = x
    last_linear_input = x
    for p, n in zip(params["blocks"], noise["blocks"]):
        last_linear_input = h
        wsig = _softplus1_ref(p["wrho"])
        bsig = _softplus1_ref(p["brho"])
        w = p["wmu"] + _softplus_beta10_ref(wsig) * n["weps"]
        b = p["bmu"] + _softplus_beta10_ref(bsig) * n["beps"]
        kl_total = kl_total + jnp.sum(_kl_normal_ref(p["wmu"], wsig, prior_var))
        kl_total = kl_total + jnp.sum(_kl_normal_ref(p["bmu"], bsig, prior_var))
        pre = h @ w.T + b
        batch, hdim = pre.shape
        logits = pre.reshape(batch, hdim // u_size, u_size)
        g = -jnp.log(-jnp.log(n["gu"].reshape(batch, hdim // u_size, u_size) + EPS) + EPS)
        t = (logits + g) / temp
        xi = jax.nn.softmax(t, axis=-1)
        out = (logits * xi).reshape(batch, hdim)
        q = jax.nn.softmax(logits, axis=-1)
        kl_lwta = jnp.mean(jnp.sum(q * (jnp.log(q + EPS) - jnp.log(1.0 / u_size)),
                                   axis=1)) / 1000.0
        kl_total = kl_total + kl_lwta
        h = out

    lp = params["blocks"][-1]
    mu_out = last_linear_input @ lp["wmu"].T + lp["bmu"]
    sig_w = jnp.exp(lp["wrho"])
    sig_b = jnp.exp(lp["brho"])
    sig_out = jnp.sqrt((last_linear_input ** 2) @ (sig_w ** 2).T + sig_b ** 2)
    ib = jnp.mean(-jnp.log(sig_out) + 0.5 * (sig_out ** 2 + mu_out ** 2) - 0.5)

    tau = horizon[:, None].astype(jnp.float32)
    xcat = jnp.concatenate([h, tau], axis=1)
    pp, pn = params["pred"], noise["pred"]
    wsig = _softplus1_ref(pp["wrho"])
    bsig = _softplus1_ref(pp["brho"])
    w = pp["wmu"] + _softplus_beta10_ref(wsig) * pn["weps"]
    b = pp["bmu"] + _softplus_beta10_ref(bsig) * pn["beps"]
    kl_total = kl_total + jnp.sum(_kl_normal_ref(pp["wmu"], wsig, prior_var))
    kl_total = kl_total + jnp.sum(_kl_normal_ref(pp["bmu"], bsig, prior_var))
    output = xcat @ (w ** 2).T + b ** 2
    outcome = tau * jax.nn.sigmoid(output)
    return -outcome, tau, kl_total, ib


# --------------------------------------------------------------------------------------
if __name__ == "__main__":
    input_dim = 16
    layers = [32, 32]
    output_dim = 1
    batch = 8

    key = jax.random.PRNGKey(0)
    kp, kx, kh, kn = jax.random.split(key, 4)

    params = init_params(kp, input_dim, layers, output_dim=output_dim)
    x = jax.random.normal(kx, (batch, input_dim), dtype=jnp.float32)
    horizon = jax.random.uniform(kh, (batch,), jnp.float32, 0.1, 5.0)
    noise = sample_noise(kn, params, batch)

    neg_outcome, tau, kl_total, ib = forward_pallas(params, x, horizon, noise)
    jax.block_until_ready((neg_outcome, tau, kl_total, ib))

    # correctness check against the pure-JAX reference of the PyTorch forward
    r_neg, r_tau, r_kl, r_ib = forward_ref(params, x, horizon, noise)
    assert neg_outcome.shape == (batch, output_dim)
    assert tau.shape == (batch, 1)
    assert jnp.allclose(neg_outcome, r_neg, rtol=5e-3, atol=5e-3), "outcome mismatch"
    assert jnp.allclose(tau, r_tau), "tau mismatch"
    assert jnp.allclose(kl_total, r_kl, rtol=5e-3, atol=5e-2), "kl mismatch"
    assert jnp.allclose(ib, r_ib, rtol=5e-3, atol=1e-2), "ib mismatch"

    print("KERNEL_OK")
</pallas_src>

<mosaic_0001>
module attributes {stable_mosaic.version = 11 : i64} {
  func.func @_fused_forward_kernel(%arg0: memref<8x17xf32, #tpu.memory_space<vmem>>, %arg1: memref<8x64xf32, #tpu.memory_space<vmem>>, %arg2: memref<17x96xf32, #tpu.memory_space<vmem>>, %arg3: memref<33x96xf32, #tpu.memory_space<vmem>>, %arg4: memref<3x34xf32, #tpu.memory_space<vmem>>, %arg5: memref<8x1xf32, #tpu.memory_space<vmem>>, %arg6: memref<2xf32, #tpu.memory_space<smem>>) attributes {dimension_semantics = [], scalar_prefetch = 0 : i64, scratch_operands = 0 : i64, tpu.core_type = #tpu.core_type<tc>} {
    %c0 = arith.constant 0 : index
    %c0_0 = arith.constant 0 : index
    %0 = vector.load %arg0[%c0, %c0_0] : memref<8x17xf32, #tpu.memory_space<vmem>>, vector<8x16xf32>
    %c0_1 = arith.constant 0 : index
    %c16 = arith.constant 16 : index
    %1 = vector.load %arg0[%c0_1, %c16] : memref<8x17xf32, #tpu.memory_space<vmem>>, vector<8x1xf32>
    %c0_2 = arith.constant 0 : index
    %c0_3 = arith.constant 0 : index
    %2 = vector.load %arg2[%c0_2, %c0_3] : memref<17x96xf32, #tpu.memory_space<vmem>>, vector<17x32xf32>
    %c0_4 = arith.constant 0 : index
    %c32 = arith.constant 32 : index
    %3 = vector.load %arg2[%c0_4, %c32] : memref<17x96xf32, #tpu.memory_space<vmem>>, vector<17x32xf32>
    %c0_5 = arith.constant 0 : index
    %c64 = arith.constant 64 : index
    %4 = vector.load %arg2[%c0_5, %c64] : memref<17x96xf32, #tpu.memory_space<vmem>>, vector<17x32xf32>
    %5 = math.exp %3 : vector<17x32xf32>
    %cst = arith.constant 1.000000e+00 : f32
    %6 = vector.broadcast %cst : f32 to vector<17x32xf32>
    %7 = arith.addf %6, %5 : vector<17x32xf32>
    %8 = math.log %7 : vector<17x32xf32>
    %cst_6 = arith.constant 1.000000e+00 : f32
    %9 = vector.broadcast %cst_6 : f32 to vector<17x32xf32>
    %10 = arith.addf %9, %5 : vector<17x32xf32>
    %cst_7 = arith.constant 1.000000e+00 : f32
    %11 = vector.broadcast %cst_7 : f32 to vector<17x32xf32>
    %12 = arith.addf %11, %5 : vector<17x32xf32>
    %13 = arith.mulf %10, %12 : vector<17x32xf32>
    %14 = arith.mulf %13, %13 : vector<17x32xf32>
    %15 = arith.mulf %14, %14 : vector<17x32xf32>
    %16 = arith.mulf %15, %13 : vector<17x32xf32>
    %cst_8 = arith.constant 1.000000e+01 : f32
    %17 = vector.broadcast %cst_8 : f32 to vector<17x32xf32>
    %18 = arith.mulf %17, %8 : vector<17x32xf32>
    %cst_9 = arith.constant 2.000000e+01 : f32
    %19 = vector.broadcast %cst_9 : f32 to vector<17x32xf32>
    %20 = arith.cmpf ogt, %18, %19 : vector<17x32xf32>
    %cst_10 = arith.constant 1.000000e+00 : f32
    %21 = vector.broadcast %cst_10 : f32 to vector<17x32xf32>
    %22 = arith.addf %21, %16 : vector<17x32xf32>
    %23 = math.log %22 : vector<17x32xf32>
    %cst_11 = arith.constant 1.000000e+01 : f32
    %24 = vector.broadcast %cst_11 : f32 to vector<17x32xf32>
    %25 = arith.divf %23, %24 : vector<17x32xf32>
    %26 = arith.select %20, %8, %25 : vector<17x32xi1>, vector<17x32xf32>
    %27 = arith.mulf %26, %4 : vector<17x32xf32>
    %28 = arith.addf %2, %27 : vector<17x32xf32>
    %29 = math.log %8 : vector<17x32xf32>
    %cst_12 = arith.constant 0.000000e+00 : f32
    %30 = vector.broadcast %cst_12 : f32 to vector<17x32xf32>
    %31 = arith.subf %30, %29 : vector<17x32xf32>
    %32 = arith.mulf %8, %8 : vector<17x32xf32>
    %33 = arith.mulf %2, %2 : vector<17x32xf32>
    %34 = arith.addf %32, %33 : vector<17x32xf32>
    %cst_13 = arith.constant 5.000000e-01 : f32
    %35 = vector.broadcast %cst_13 : f32 to vector<17x32xf32>
    %36 = arith.mulf %34, %35 : vector<17x32xf32>
    %37 = arith.addf %31, %36 : vector<17x32xf32>
    %cst_14 = arith.constant 5.000000e-01 : f32
    %38 = vector.broadcast %cst_14 : f32 to vector<17x32xf32>
    %39 = arith.subf %37, %38 : vector<17x32xf32>
    %40 = vector.shape_cast %39 : vector<17x32xf32> to vector<1x17x32xf32>
    %cst_15 = arith.constant dense<0.000000e+00> : vector<1xf32>
    %41 = vector.multi_reduction <add>, %40, %cst_15 [1, 2] : vector<1x17x32xf32> to vector<1xf32>
    %42 = vector.shape_cast %41 : vector<1xf32> to vector<1x1x1xf32>
    %43 = vector.extract %42[0, 0, 0] : f32 from vector<1x1x1xf32>
    %cst_16 = arith.constant 0.000000e+00 : f32
    %44 = arith.addf %cst_16, %43 : f32
    %45 = vector.extract_strided_slice %28 {offsets = [0, 0], sizes = [16, 32], strides = [1, 1]} : vector<17x32xf32> to vector<16x32xf32>
    %cst_17 = arith.constant dense<0.000000e+00> : vector<8x32xf32>
    %46 = tpu.matmul %0, %45, %cst_17 {dimension_numbers = #tpu.dot_dimension_numbers<[1], [0], [0], [1], [0, 0, 1, 1], [], []>} : vector<8x16xf32>, vector<16x32xf32>, vector<8x32xf32> -> vector<8x32xf32>
    %47 = vector.extract_strided_slice %28 {offsets = [16, 0], sizes = [1, 32], strides = [1, 1]} : vector<17x32xf32> to vector<1x32xf32>
    %48 = vector.broadcast %47 : vector<1x32xf32> to vector<8x32xf32>
    %49 = arith.addf %46, %48 : vector<8x32xf32>
    %c0_18 = arith.constant 0 : index
    %c0_19 = arith.constant 0 : index
    %50 = vector.load %arg1[%c0_18, %c0_19] : memref<8x64xf32, #tpu.memory_space<vmem>>, vector<8x32xf32>
    %cst_20 = arith.constant 9.99999993E-9 : f32
    %51 = vector.broadcast %cst_20 : f32 to vector<8x32xf32>
    %52 = arith.addf %50, %51 : vector<8x32xf32>
    %53 = math.log %52 : vector<8x32xf32>
    %cst_21 = arith.constant 0.000000e+00 : f32
    %54 = vector.broadcast %cst_21 : f32 to vector<8x32xf32>
    %55 = arith.subf %54, %53 : vector<8x32xf32>
    %cst_22 = arith.constant 9.99999993E-9 : f32
    %56 = vector.broadcast %cst_22 : f32 to vector<8x32xf32>
    %57 = arith.addf %55, %56 : vector<8x32xf32>
    %58 = math.log %57 : vector<8x32xf32>
    %cst_23 = arith.constant 0.000000e+00 : f32
    %59 = vector.broadcast %cst_23 : f32 to vector<8x32xf32>
    %60 = arith.subf %59, %58 : vector<8x32xf32>
    %61 = arith.addf %49, %60 : vector<8x32xf32>
    %cst_24 = arith.constant 6.700000e-01 : f32
    %62 = vector.broadcast %cst_24 : f32 to vector<8x32xf32>
    %63 = arith.divf %61, %62 : vector<8x32xf32>
    %64 = vector.extract_strided_slice %63 {offsets = [0, 16], sizes = [8, 16], strides = [1, 1]} : vector<8x32xf32> to vector<8x16xf32>
    %65 = vector.extract_strided_slice %63 {offsets = [0, 0], sizes = [8, 16], strides = [1, 1]} : vector<8x32xf32> to vector<8x16xf32>
    %66 = tpu.concatenate %64, %65 in 1 : vector<8x16xf32>, vector<8x16xf32> -> vector<8x32xf32>
    %67 = arith.subf %63, %66 : vector<8x32xf32>
    %68 = math.absf %67 : vector<8x32xf32>
    %cst_25 = arith.constant 0.000000e+00 : f32
    %69 = vector.broadcast %cst_25 : f32 to vector<8x32xf32>
    %70 = arith.subf %69, %68 : vector<8x32xf32>
    %71 = math.exp %70 : vector<8x32xf32>
    %cst_26 = arith.constant 0.000000e+00 : f32
    %72 = vector.broadcast %cst_26 : f32 to vector<8x32xf32>
    %73 = arith.cmpf oge, %67, %72 : vector<8x32xf32>
    %cst_27 = arith.constant 1.000000e+00 : f32
    %74 = vector.broadcast %cst_27 : f32 to vector<8x32xf32>
    %75 = arith.addf %74, %71 : vector<8x32xf32>
    %cst_28 = arith.constant 1.000000e+00 : f32
    %76 = vector.broadcast %cst_28 : f32 to vector<8x32xf32>
    %77 = arith.divf %76, %75 : vector<8x32xf32>
    %cst_29 = arith.constant 1.000000e+00 : f32
    %78 = vector.broadcast %cst_29 : f32 to vector<8x32xf32>
    %79 = arith.addf %78, %71 : vector<8x32xf32>
    %80 = arith.divf %71, %79 : vector<8x32xf32>
    %81 = arith.select %73, %77, %80 : vector<8x32xi1>, vector<8x32xf32>
    %82 = vector.extract_strided_slice %49 {offsets = [0, 16], sizes = [8, 16], strides = [1, 1]} : vector<8x32xf32> to vector<8x16xf32>
    %83 = vector.extract_strided_slice %49 {offsets = [0, 0], sizes = [8, 16], strides = [1, 1]} : vector<8x32xf32> to vector<8x16xf32>
    %84 = tpu.concatenate %82, %83 in 1 : vector<8x16xf32>, vector<8x16xf32> -> vector<8x32xf32>
    %85 = arith.subf %49, %84 : vector<8x32xf32>
    %86 = math.absf %85 : vector<8x32xf32>
    %cst_30 = arith.constant 0.000000e+00 : f32
    %87 = vector.broadcast %cst_30 : f32 to vector<8x32xf32>
    %88 = arith.subf %87, %86 : vector<8x32xf32>
    %89 = math.exp %88 : vector<8x32xf32>
    %cst_31 = arith.constant 0.000000e+00 : f32
    %90 = vector.broadcast %cst_31 : f32 to vector<8x32xf32>
    %91 = arith.cmpf oge, %85, %90 : vector<8x32xf32>
    %cst_32 = arith.constant 1.000000e+00 : f32
    %92 = vector.broadcast %cst_32 : f32 to vector<8x32xf32>
    %93 = arith.addf %92, %89 : vector<8x32xf32>
    %cst_33 = arith.constant 1.000000e+00 : f32
    %94 = vector.broadcast %cst_33 : f32 to vector<8x32xf32>
    %95 = arith.divf %94, %93 : vector<8x32xf32>
    %cst_34 = arith.constant 1.000000e+00 : f32
    %96 = vector.broadcast %cst_34 : f32 to vector<8x32xf32>
    %97 = arith.addf %96, %89 : vector<8x32xf32>
    %98 = arith.divf %89, %97 : vector<8x32xf32>
    %99 = arith.select %91, %95, %98 : vector<8x32xi1>, vector<8x32xf32>
    %cst_35 = arith.constant 9.99999993E-9 : f32
    %100 = vector.broadcast %cst_35 : f32 to vector<8x32xf32>
    %101 = arith.addf %99, %100 : vector<8x32xf32>
    %102 = math.log %101 : vector<8x32xf32>
    %cst_36 = arith.constant -0.693147182 : f32
    %103 = vector.broadcast %cst_36 : f32 to vector<8x32xf32>
    %104 = arith.subf %102, %103 : vector<8x32xf32>
    %105 = arith.mulf %99, %104 : vector<8x32xf32>
    %106 = vector.shape_cast %105 : vector<8x32xf32> to vector<1x8x32xf32>
    %cst_37 = arith.constant dense<0.000000e+00> : vector<1xf32>
    %107 = vector.multi_reduction <add>, %106, %cst_37 [1, 2] : vector<1x8x32xf32> to vector<1xf32>
    %108 = vector.shape_cast %107 : vector<1xf32> to vector<1x1x1xf32>
    %109 = vector.extract %108[0, 0, 0] : f32 from vector<1x1x1xf32>
    %cst_38 = arith.constant 1.600000e+04 : f32
    %110 = arith.divf %109, %cst_38 : f32
    %111 = arith.addf %44, %110 : f32
    %112 = arith.mulf %49, %81 : vector<8x32xf32>
    %c0_39 = arith.constant 0 : index
    %c0_40 = arith.constant 0 : index
    %113 = vector.load %arg3[%c0_39, %c0_40] : memref<33x96xf32, #tpu.memory_space<vmem>>, vector<33x32xf32>
    %c0_41 = arith.constant 0 : index
    %c32_42 = arith.constant 32 : index
    %114 = vector.load %arg3[%c0_41, %c32_42] : memref<33x96xf32, #tpu.memory_space<vmem>>, vector<33x32xf32>
    %c0_43 = arith.constant 0 : index
    %c64_44 = arith.constant 64 : index
    %115 = vector.load %arg3[%c0_43, %c64_44] : memref<33x96xf32, #tpu.memory_space<vmem>>, vector<33x32xf32>
    %116 = math.exp %114 : vector<33x32xf32>
    %cst_45 = arith.constant 1.000000e+00 : f32
    %117 = vector.broadcast %cst_45 : f32 to vector<33x32xf32>
    %118 = arith.addf %117, %116 : vector<33x32xf32>
    %119 = math.log %118 : vector<33x32xf32>
    %cst_46 = arith.constant 1.000000e+00 : f32
    %120 = vector.broadcast %cst_46 : f32 to vector<33x32xf32>
    %121 = arith.addf %120, %116 : vector<33x32xf32>
    %cst_47 = arith.constant 1.000000e+00 : f32
    %122 = vector.broadcast %cst_47 : f32 to vector<33x32xf32>
    %123 = arith.addf %122, %116 : vector<33x32xf32>
    %124 = arith.mulf %121, %123 : vector<33x32xf32>
    %125 = arith.mulf %124, %124 : vector<33x32xf32>
    %126 = arith.mulf %125, %125 : vector<33x32xf32>
    %127 = arith.mulf %126, %124 : vector<33x32xf32>
    %cst_48 = arith.constant 1.000000e+01 : f32
    %128 = vector.broadcast %cst_48 : f32 to vector<33x32xf32>
    %129 = arith.mulf %128, %119 : vector<33x32xf32>
    %cst_49 = arith.constant 2.000000e+01 : f32
    %130 = vector.broadcast %cst_49 : f32 to vector<33x32xf32>
    %131 = arith.cmpf ogt, %129, %130 : vector<33x32xf32>
    %cst_50 = arith.constant 1.000000e+00 : f32
    %132 = vector.broadcast %cst_50 : f32 to vector<33x32xf32>
    %133 = arith.addf %132, %127 : vector<33x32xf32>
    %134 = math.log %133 : vector<33x32xf32>
    %cst_51 = arith.constant 1.000000e+01 : f32
    %135 = vector.broadcast %cst_51 : f32 to vector<33x32xf32>
    %136 = arith.divf %134, %135 : vector<33x32xf32>
    %137 = arith.select %131, %119, %136 : vector<33x32xi1>, vector<33x32xf32>
    %138 = arith.mulf %137, %115 : vector<33x32xf32>
    %139 = arith.addf %113, %138 : vector<33x32xf32>
    %140 = math.log %119 : vector<33x32xf32>
    %cst_52 = arith.constant 0.000000e+00 : f32
    %141 = vector.broadcast %cst_52 : f32 to vector<33x32xf32>
    %142 = arith.subf %141, %140 : vector<33x32xf32>
    %143 = arith.mulf %119, %119 : vector<33x32xf32>
    %144 = arith.mulf %113, %113 : vector<33x32xf32>
    %145 = arith.addf %143, %144 : vector<33x32xf32>
    %cst_53 = arith.constant 5.000000e-01 : f32
    %146 = vector.broadcast %cst_53 : f32 to vector<33x32xf32>
    %147 = arith.mulf %145, %146 : vector<33x32xf32>
    %148 = arith.addf %142, %147 : vector<33x32xf32>
    %cst_54 = arith.constant 5.000000e-01 : f32
    %149 = vector.broadcast %cst_54 : f32 to vector<33x32xf32>
    %150 = arith.subf %148, %149 : vector<33x32xf32>
    %151 = vector.shape_cast %150 : vector<33x32xf32> to vector<1x33x32xf32>
    %cst_55 = arith.constant dense<0.000000e+00> : vector<1xf32>
    %152 = vector.multi_reduction <add>, %151, %cst_55 [1, 2] : vector<1x33x32xf32> to vector<1xf32>
    %153 = vector.shape_cast %152 : vector<1xf32> to vector<1x1x1xf32>
    %154 = vector.extract %153[0, 0, 0] : f32 from vector<1x1x1xf32>
    %155 = arith.addf %111, %154 : f32
    %156 = tpu.concatenate %139, %113 in 1 : vector<33x32xf32>, vector<33x32xf32> -> vector<33x64xf32>
    %157 = vector.extract_strided_slice %156 {offsets = [0, 0], sizes = [32, 64], strides = [1, 1]} : vector<33x64xf32> to vector<32x64xf32>
    %cst_56 = arith.constant dense<0.000000e+00> : vector<8x64xf32>
    %158 = tpu.matmul %112, %157, %cst_56 {dimension_numbers = #tpu.dot_dimension_numbers<[1], [0], [0], [1], [0, 0, 1, 1], [], []>} : vector<8x32xf32>, vector<32x64xf32>, vector<8x64xf32> -> vector<8x64xf32>
    %159 = vector.extract_strided_slice %156 {offsets = [32, 0], sizes = [1, 64], strides = [1, 1]} : vector<33x64xf32> to vector<1x64xf32>
    %160 = vector.broadcast %159 : vector<1x64xf32> to vector<8x64xf32>
    %161 = arith.addf %158, %160 : vector<8x64xf32>
    %162 = vector.extract_strided_slice %161 {offsets = [0, 0], sizes = [8, 32], strides = [1, 1]} : vector<8x64xf32> to vector<8x32xf32>
    %163 = vector.extract_strided_slice %161 {offsets = [0, 32], sizes = [8, 32], strides = [1, 1]} : vector<8x64xf32> to vector<8x32xf32>
    %c0_57 = arith.constant 0 : index
    %c32_58 = arith.constant 32 : index
    %164 = vector.load %arg1[%c0_57, %c32_58] : memref<8x64xf32, #tpu.memory_space<vmem>>, vector<8x32xf32>
    %cst_59 = arith.constant 9.99999993E-9 : f32
    %165 = vector.broadcast %cst_59 : f32 to vector<8x32xf32>
    %166 = arith.addf %164, %165 : vector<8x32xf32>
    %167 = math.log %166 : vector<8x32xf32>
    %cst_60 = arith.constant 0.000000e+00 : f32
    %168 = vector.broadcast %cst_60 : f32 to vector<8x32xf32>
    %169 = arith.subf %168, %167 : vector<8x32xf32>
    %cst_61 = arith.constant 9.99999993E-9 : f32
    %170 = vector.broadcast %cst_61 : f32 to vector<8x32xf32>
    %171 = arith.addf %169, %170 : vector<8x32xf32>
    %172 = math.log %171 : vector<8x32xf32>
    %cst_62 = arith.constant 0.000000e+00 : f32
    %173 = vector.broadcast %cst_62 : f32 to vector<8x32xf32>
    %174 = arith.subf %173, %172 : vector<8x32xf32>
    %175 = arith.addf %162, %174 : vector<8x32xf32>
    %cst_63 = arith.constant 6.700000e-01 : f32
    %176 = vector.broadcast %cst_63 : f32 to vector<8x32xf32>
    %177 = arith.divf %175, %176 : vector<8x32xf32>
    %178 = vector.extract_strided_slice %177 {offsets = [0, 16], sizes = [8, 16], strides = [1, 1]} : vector<8x32xf32> to vector<8x16xf32>
    %179 = vector.extract_strided_slice %177 {offsets = [0, 0], sizes = [8, 16], strides = [1, 1]} : vector<8x32xf32> to vector<8x16xf32>
    %180 = tpu.concatenate %178, %179 in 1 : vector<8x16xf32>, vector<8x16xf32> -> vector<8x32xf32>
    %181 = arith.subf %177, %180 : vector<8x32xf32>
    %182 = math.absf %181 : vector<8x32xf32>
    %cst_64 = arith.constant 0.000000e+00 : f32
    %183 = vector.broadcast %cst_64 : f32 to vector<8x32xf32>
    %184 = arith.subf %183, %182 : vector<8x32xf32>
    %185 = math.exp %184 : vector<8x32xf32>
    %cst_65 = arith.constant 0.000000e+00 : f32
    %186 = vector.broadcast %cst_65 : f32 to vector<8x32xf32>
    %187 = arith.cmpf oge, %181, %186 : vector<8x32xf32>
    %cst_66 = arith.constant 1.000000e+00 : f32
    %188 = vector.broadcast %cst_66 : f32 to vector<8x32xf32>
    %189 = arith.addf %188, %185 : vector<8x32xf32>
    %cst_67 = arith.constant 1.000000e+00 : f32
    %190 = vector.broadcast %cst_67 : f32 to vector<8x32xf32>
    %191 = arith.divf %190, %189 : vector<8x32xf32>
    %cst_68 = arith.constant 1.000000e+00 : f32
    %192 = vector.broadcast %cst_68 : f32 to vector<8x32xf32>
    %193 = arith.addf %192, %185 : vector<8x32xf32>
    %194 = arith.divf %185, %193 : vector<8x32xf32>
    %195 = arith.select %187, %191, %194 : vector<8x32xi1>, vector<8x32xf32>
    %196 = vector.extract_strided_slice %162 {offsets = [0, 16], sizes = [8, 16], strides = [1, 1]} : vector<8x32xf32> to vector<8x16xf32>
    %197 = vector.extract_strided_slice %162 {offsets = [0, 0], sizes = [8, 16], strides = [1, 1]} : vector<8x32xf32> to vector<8x16xf32>
    %198 = tpu.concatenate %196, %197 in 1 : vector<8x16xf32>, vector<8x16xf32> -> vector<8x32xf32>
    %199 = arith.subf %162, %198 : vector<8x32xf32>
    %200 = math.absf %199 : vector<8x32xf32>
    %cst_69 = arith.constant 0.000000e+00 : f32
    %201 = vector.broadcast %cst_69 : f32 to vector<8x32xf32>
    %202 = arith.subf %201, %200 : vector<8x32xf32>
    %203 = math.exp %202 : vector<8x32xf32>
    %cst_70 = arith.constant 0.000000e+00 : f32
    %204 = vector.broadcast %cst_70 : f32 to vector<8x32xf32>
    %205 = arith.cmpf oge, %199, %204 : vector<8x32xf32>
    %cst_71 = arith.constant 1.000000e+00 : f32
    %206 = vector.broadcast %cst_71 : f32 to vector<8x32xf32>
    %207 = arith.addf %206, %203 : vector<8x32xf32>
    %cst_72 = arith.constant 1.000000e+00 : f32
    %208 = vector.broadcast %cst_72 : f32 to vector<8x32xf32>
    %209 = arith.divf %208, %207 : vector<8x32xf32>
    %cst_73 = arith.constant 1.000000e+00 : f32
    %210 = vector.broadcast %cst_73 : f32 to vector<8x32xf32>
    %211 = arith.addf %210, %203 : vector<8x32xf32>
    %212 = arith.divf %203, %211 : vector<8x32xf32>
    %213 = arith.select %205, %209, %212 : vector<8x32xi1>, vector<8x32xf32>
    %cst_74 = arith.constant 9.99999993E-9 : f32
    %214 = vector.broadcast %cst_74 : f32 to vector<8x32xf32>
    %215 = arith.addf %213, %214 : vector<8x32xf32>
    %216 = math.log %215 : vector<8x32xf32>
    %cst_75 = arith.constant -0.693147182 : f32
    %217 = vector.broadcast %cst_75 : f32 to vector<8x32xf32>
    %218 = arith.subf %216, %217 : vector<8x32xf32>
    %219 = arith.mulf %213, %218 : vector<8x32xf32>
    %220 = vector.shape_cast %219 : vector<8x32xf32> to vector<1x8x32xf32>
    %cst_76 = arith.constant dense<0.000000e+00> : vector<1xf32>
    %221 = vector.multi_reduction <add>, %220, %cst_76 [1, 2] : vector<1x8x32xf32> to vector<1xf32>
    %222 = vector.shape_cast %221 : vector<1xf32> to vector<1x1x1xf32>
    %223 = vector.extract %222[0, 0, 0] : f32 from vector<1x1x1xf32>
    %cst_77 = arith.constant 1.600000e+04 : f32
    %224 = arith.divf %223, %cst_77 : f32
    %225 = arith.addf %155, %224 : f32
    %226 = arith.mulf %162, %195 : vector<8x32xf32>
    %227 = arith.mulf %116, %116 : vector<33x32xf32>
    %228 = arith.mulf %112, %112 : vector<8x32xf32>
    %229 = vector.extract_strided_slice %227 {offsets = [0, 0], sizes = [32, 32], strides = [1, 1]} : vector<33x32xf32> to vector<32x32xf32>
    %cst_78 = arith.constant dense<0.000000e+00> : vector<8x32xf32>
    %230 = tpu.matmul %228, %229, %cst_78 {dimension_numbers = #tpu.dot_dimension_numbers<[1], [0], [0], [1], [0, 0, 1, 1], [], []>} : vector<8x32xf32>, vector<32x32xf32>, vector<8x32xf32> -> vector<8x32xf32>
    %231 = vector.extract_strided_slice %227 {offsets = [32, 0], sizes = [1, 32], strides = [1, 1]} : vector<33x32xf32> to vector<1x32xf32>
    %232 = vector.broadcast %231 : vector<1x32xf32> to vector<8x32xf32>
    %233 = arith.addf %230, %232 : vector<8x32xf32>
    %234 = math.log %233 : vector<8x32xf32>
    %cst_79 = arith.constant -5.000000e-01 : f32
    %235 = vector.broadcast %cst_79 : f32 to vector<8x32xf32>
    %236 = arith.mulf %235, %234 : vector<8x32xf32>
    %237 = arith.mulf %163, %163 : vector<8x32xf32>
    %238 = arith.addf %233, %237 : vector<8x32xf32>
    %cst_80 = arith.constant 5.000000e-01 : f32
    %239 = vector.broadcast %cst_80 : f32 to vector<8x32xf32>
    %240 = arith.mulf %239, %238 : vector<8x32xf32>
    %241 = arith.addf %236, %240 : vector<8x32xf32>
    %cst_81 = arith.constant 5.000000e-01 : f32
    %242 = vector.broadcast %cst_81 : f32 to vector<8x32xf32>
    %243 = arith.subf %241, %242 : vector<8x32xf32>
    %244 = vector.shape_cast %243 : vector<8x32xf32> to vector<1x8x32xf32>
    %cst_82 = arith.constant dense<0.000000e+00> : vector<1xf32>
    %245 = vector.multi_reduction <add>, %244, %cst_82 [1, 2] : vector<1x8x32xf32> to vector<1xf32>
    %246 = vector.shape_cast %245 : vector<1xf32> to vector<1x1x1xf32>
    %247 = vector.extract %246[0, 0, 0] : f32 from vector<1x1x1xf32>
    %cst_83 = arith.constant 2.560000e+02 : f32
    %248 = arith.divf %247, %cst_83 : f32
    %c0_84 = arith.constant 0 : index
    %c0_85 = arith.constant 0 : index
    %249 = vector.load %arg4[%c0_84, %c0_85] : memref<3x34xf32, #tpu.memory_space<vmem>>, vector<1x34xf32>
    %c1 = arith.constant 1 : index
    %c0_86 = arith.constant 0 : index
    %250 = vector.load %arg4[%c1, %c0_86] : memref<3x34xf32, #tpu.memory_space<vmem>>, vector<1x34xf32>
    %c2 = arith.constant 2 : index
    %c0_87 = arith.constant 0 : index
    %251 = vector.load %arg4[%c2, %c0_87] : memref<3x34xf32, #tpu.memory_space<vmem>>, vector<1x34xf32>
    %252 = math.exp %250 : vector<1x34xf32>
    %cst_88 = arith.constant 1.000000e+00 : f32
    %253 = vector.broadcast %cst_88 : f32 to vector<1x34xf32>
    %254 = arith.addf %253, %252 : vector<1x34xf32>
    %255 = math.log %254 : vector<1x34xf32>
    %cst_89 = arith.constant 1.000000e+00 : f32
    %256 = vector.broadcast %cst_89 : f32 to vector<1x34xf32>
    %257 = arith.addf %256, %252 : vector<1x34xf32>
    %cst_90 = arith.constant 1.000000e+00 : f32
    %258 = vector.broadcast %cst_90 : f32 to vector<1x34xf32>
    %259 = arith.addf %258, %252 : vector<1x34xf32>
    %260 = arith.mulf %257, %259 : vector<1x34xf32>
    %261 = arith.mulf %260, %260 : vector<1x34xf32>
    %262 = arith.mulf %261, %261 : vector<1x34xf32>
    %263 = arith.mulf %262, %260 : vector<1x34xf32>
    %cst_91 = arith.constant 1.000000e+01 : f32
    %264 = vector.broadcast %cst_91 : f32 to vector<1x34xf32>
    %265 = arith.mulf %264, %255 : vector<1x34xf32>
    %cst_92 = arith.constant 2.000000e+01 : f32
    %266 = vector.broadcast %cst_92 : f32 to vector<1x34xf32>
    %267 = arith.cmpf ogt, %265, %266 : vector<1x34xf32>
    %cst_93 = arith.constant 1.000000e+00 : f32
    %268 = vector.broadcast %cst_93 : f32 to vector<1x34xf32>
    %269 = arith.addf %268, %263 : vector<1x34xf32>
    %270 = math.log %269 : vector<1x34xf32>
    %cst_94 = arith.constant 1.000000e+01 : f32
    %271 = vector.broadcast %cst_94 : f32 to vector<1x34xf32>
    %272 = arith.divf %270, %271 : vector<1x34xf32>
    %273 = arith.select %267, %255, %272 : vector<1x34xi1>, vector<1x34xf32>
    %274 = arith.mulf %273, %251 : vector<1x34xf32>
    %275 = arith.addf %249, %274 : vector<1x34xf32>
    %276 = math.log %255 : vector<1x34xf32>
    %cst_95 = arith.constant 0.000000e+00 : f32
    %277 = vector.broadcast %cst_95 : f32 to vector<1x34xf32>
    %278 = arith.subf %277, %276 : vector<1x34xf32>
    %279 = arith.mulf %255, %255 : vector<1x34xf32>
    %280 = arith.mulf %249, %249 : vector<1x34xf32>
    %281 = arith.addf %279, %280 : vector<1x34xf32>
    %cst_96 = arith.constant 5.000000e-01 : f32
    %282 = vector.broadcast %cst_96 : f32 to vector<1x34xf32>
    %283 = arith.mulf %281, %282 : vector<1x34xf32>
    %284 = arith.addf %278, %283 : vector<1x34xf32>
    %cst_97 = arith.constant 5.000000e-01 : f32
    %285 = vector.broadcast %cst_97 : f32 to vector<1x34xf32>
    %286 = arith.subf %284, %285 : vector<1x34xf32>
    %287 = vector.shape_cast %286 : vector<1x34xf32> to vector<1x1x34xf32>
    %cst_98 = arith.constant dense<0.000000e+00> : vector<1xf32>
    %288 = vector.multi_reduction <add>, %287, %cst_98 [1, 2] : vector<1x1x34xf32> to vector<1xf32>
    %289 = vector.shape_cast %288 : vector<1xf32> to vector<1x1x1xf32>
    %290 = vector.extract %289[0, 0, 0] : f32 from vector<1x1x1xf32>
    %291 = arith.addf %225, %290 : f32
    %292 = arith.mulf %275, %275 : vector<1x34xf32>
    %293 = vector.extract_strided_slice %292 {offsets = [0, 0], sizes = [1, 32], strides = [1, 1]} : vector<1x34xf32> to vector<1x32xf32>
    %294 = vector.broadcast %293 : vector<1x32xf32> to vector<8x32xf32>
    %295 = arith.mulf %226, %294 : vector<8x32xf32>
    %cst_99 = arith.constant dense<0.000000e+00> : vector<8xf32>
    %296 = vector.multi_reduction <add>, %295, %cst_99 [1] : vector<8x32xf32> to vector<8xf32>
    %297 = vector.shape_cast %296 : vector<8xf32> to vector<8x1xf32>
    %298 = vector.extract_strided_slice %292 {offsets = [0, 32], sizes = [1, 1], strides = [1, 1]} : vector<1x34xf32> to vector<1x1xf32>
    %299 = vector.broadcast %298 : vector<1x1xf32> to vector<8x1xf32>
    %300 = arith.mulf %1, %299 : vector<8x1xf32>
    %301 = arith.addf %297, %300 : vector<8x1xf32>
    %302 = vector.extract_strided_slice %292 {offsets = [0, 33], sizes = [1, 1], strides = [1, 1]} : vector<1x34xf32> to vector<1x1xf32>
    %303 = vector.broadcast %302 : vector<1x1xf32> to vector<8x1xf32>
    %304 = arith.addf %301, %303 : vector<8x1xf32>
    %305 = math.absf %304 : vector<8x1xf32>
    %cst_100 = arith.constant 0.000000e+00 : f32
    %306 = vector.broadcast %cst_100 : f32 to vector<8x1xf32>
    %307 = arith.subf %306, %305 : vector<8x1xf32>
    %308 = math.exp %307 : vector<8x1xf32>
    %cst_101 = arith.constant 0.000000e+00 : f32
    %309 = vector.broadcast %cst_101 : f32 to vector<8x1xf32>
    %310 = arith.cmpf oge, %304, %309 : vector<8x1xf32>
    %cst_102 = arith.constant 1.000000e+00 : f32
    %311 = vector.broadcast %cst_102 : f32 to vector<8x1xf32>
    %312 = arith.addf %311, %308 : vector<8x1xf32>
    %cst_103 = arith.constant 1.000000e+00 : f32
    %313 = vector.broadcast %cst_103 : f32 to vector<8x1xf32>
    %314 = arith.divf %313, %312 : vector<8x1xf32>
    %cst_104 = arith.constant 1.000000e+00 : f32
    %315 = vector.broadcast %cst_104 : f32 to vector<8x1xf32>
    %316 = arith.addf %315, %308 : vector<8x1xf32>
    %317 = arith.divf %308, %316 : vector<8x1xf32>
    %318 = arith.select %310, %314, %317 : vector<8x1xi1>, vector<8x1xf32>
    %319 = arith.mulf %1, %318 : vector<8x1xf32>
    %cst_105 = arith.constant 0.000000e+00 : f32
    %320 = vector.broadcast %cst_105 : f32 to vector<8x1xf32>
    %321 = arith.subf %320, %319 : vector<8x1xf32>
    %c0_106 = arith.constant 0 : index
    %c0_107 = arith.constant 0 : index
    %322 = vector.load %arg5[%c0_106, %c0_107] : memref<8x1xf32, #tpu.memory_space<vmem>>, vector<8x1xf32>
    tpu.vector_store %arg5[%c0_106, %c0_107], %321 {strides = array<i32>} : memref<8x1xf32, #tpu.memory_space<vmem>>, vector<8x1xf32>,
    %c0_108 = arith.constant 0 : index
    %323 = memref.load %arg6[%c0_108] : memref<2xf32, #tpu.memory_space<smem>>
    memref.store %291, %arg6[%c0_108] : memref<2xf32, #tpu.memory_space<smem>>
    %c1_109 = arith.constant 1 : index
    %324 = memref.load %arg6[%c1_109] : memref<2xf32, #tpu.memory_space<smem>>
    memref.store %248, %arg6[%c1_109] : memref<2xf32, #tpu.memory_space<smem>>
    return
  }
}

</mosaic_0001>

<llo_original>
// kernel: tpu_custom_call.1
$region0: #{tpu_custom_call.1}
  #allocation0 [shape = 'u32[]', space=smem, size = 0x4, offset = 0x4, fixed_abs, tag = 'smem constant byte address 0x4 - core index']
  #allocation1 [shape = 'u32[72,128]{1,0:T(1,128)}', space=vmem, size = 0x9000, scoped, tag = 'internal scratch']
  %s0 = inlined_call_operand.hbm [shape: f32[8,17], index: 0, kind: input, shape index: {}]
  %s1 = inlined_call_operand.hbm [shape: f32[8,64], index: 1, kind: input, shape index: {}]
  %s2 = inlined_call_operand.hbm [shape: f32[17,96], index: 2, kind: input, shape index: {}]
  %s3 = inlined_call_operand.hbm [shape: f32[33,96], index: 3, kind: input, shape index: {}]
  %s4 = inlined_call_operand.hbm [shape: f32[3,34], index: 4, kind: input, shape index: {}]
  %s5 = inlined_call_operand.vmem [shape: f32[8,1], index: 5, kind: output, shape index: {0}]
  %s6 = inlined_call_operand.hbm [shape: f32[2], index: 6, kind: output, shape index: {1}]
  %7 = xla_tuple %s5, %s6
  %s8 = sld [smem:[#allocation0]]
  $region58: #{tpu_custom_call.1} parent=0
    _
  %s10 = ssub.s32 1, %s8
  %s11 = scalar_select 0, %s10, %s8
  $region1: #{tpu_custom_call.1} parent=0
    #allocation2 [shape = 'u8[4096]{0}', space=vmem, size = 0x1000, scoped, tag = 'input window, operand 0, single buffered']
    #allocation3 [shape = 's32[1]{0}', space=sflag, size = 0x4, scoped, tag = 'scoped memory for tpu_custom_call.1']
    #allocation4 [shape = 's32[1]{0}', space=sflag, size = 0x4, scoped, tag = 'scoped memory for tpu_custom_call.1']
    #allocation5 [shape = 'u8[4096]{0}', space=vmem, size = 0x1000, scoped, tag = 'input window, operand 1, single buffered']
    #allocation6 [shape = 's32[1]{0}', space=sflag, size = 0x4, scoped, tag = 'scoped memory for tpu_custom_call.1']
    #allocation7 [shape = 'u8[12288]{0}', space=vmem, size = 0x3000, scoped, tag = 'input window, operand 2, single buffered']
    #allocation8 [shape = 'u8[20480]{0}', space=vmem, size = 0x5000, scoped, tag = 'input window, operand 3, single buffered']
    #allocation9 [shape = 's32[1]{0}', space=sflag, size = 0x4, scoped, tag = 'scoped memory for tpu_custom_call.1']
    #allocation10 [shape = 'u8[2048]{0}', space=vmem, size = 0x800, scoped, tag = 'input window, operand 4, single buffered']
    #allocation11 [shape = 'u8[512]{0}', space=smem, size = 0x200, scoped, tag = 'output window, operand 1, single buffered']
    %12 = vsyncpa [#allocation3], 0
    %13 = vsyncpa [#allocation6], 0
    %14 = vsyncpa [#allocation9], 0
    %15 = vsyncpa [#allocation4], 0
    // Predicated region
    $region2: #{tpu_custom_call.1} parent=1 // pred_check
      _
    $region3: #{tpu_custom_call.1} parent=1 // pred_check_branch
      %17 = sbr.rel (0) target = $region5
    $region4: #{tpu_custom_call.1} parent=1 // pred_region
      %19 = vsyncadd [#allocation3], 0
      %s21 = sshll.u32 %s0, 4
      %s22 = int_to_ptr.hbm [resolvable:$true] %s21
      %s23 = sshll.u32 [#allocation2], 4
      %s24 = int_to_ptr.vmem [resolvable:$true] %s23
      %26 = dma.hbm_to_vmem [thread:$0]  %s22, 128, %s24, [#allocation3]
    $region5: #{tpu_custom_call.1} parent=1 // pred_fallthru
      _
    // Predicated region
    $region6: #{tpu_custom_call.1} parent=1 // pred_check
      _
    $region7: #{tpu_custom_call.1} parent=1 // pred_check_branch
      %28 = sbr.rel (0) target = $region9
    $region8: #{tpu_custom_call.1} parent=1 // pred_region
      %30 = vsyncadd [#allocation6], 0
      %s32 = sshll.u32 %s1, 4
      %s33 = int_to_ptr.hbm [resolvable:$true] %s32
      %s34 = sshll.u32 [#allocation5], 4
      %s35 = int_to_ptr.vmem [resolvable:$true] %s34
      %37 = dma.hbm_to_vmem [thread:$0]  %s33, 128, %s35, [#allocation6]
    $region9: #{tpu_custom_call.1} parent=1 // pred_fallthru
      _
    // Predicated region
    $region10: #{tpu_custom_call.1} parent=1 // pred_check
      _
    $region11: #{tpu_custom_call.1} parent=1 // pred_check_branch
      %39 = sbr.rel (0) target = $region13
    $region12: #{tpu_custom_call.1} parent=1 // pred_region
      %41 = vsyncadd [#allocation6], 0
      %s42 = sshll.u32 %s2, 4
      %s43 = int_to_ptr.hbm [resolvable:$true] %s42
      %s44 = sshll.u32 [#allocation7], 4
      %s45 = int_to_ptr.vmem [resolvable:$true] %s44
      %50 = dma.hbm_to_vmem [thread:$0]  %s43, 384, %s45, [#allocation6], 128, 128, 8
    $region13: #{tpu_custom_call.1} parent=1 // pred_fallthru
      _
    // Predicated region
    $region14: #{tpu_custom_call.1} parent=1 // pred_check
      _
    $region15: #{tpu_custom_call.1} parent=1 // pred_check_branch
      %52 = sbr.rel (0) target = $region17
    $region16: #{tpu_custom_call.1} parent=1 // pred_region
      %54 = vsyncadd [#allocation9], 0
      %s55 = sshll.u32 %s3, 4
      %s56 = int_to_ptr.hbm [resolvable:$true] %s55
      %s57 = sshll.u32 [#allocation8], 4
      %s58 = int_to_ptr.vmem [resolvable:$true] %s57
      %63 = dma.hbm_to_vmem [thread:$0]  %s56, 640, %s58, [#allocation9], 128, 128, 8
    $region17: #{tpu_custom_call.1} parent=1 // pred_fallthru
      _
    // Predicated region
    $region18: #{tpu_custom_call.1} parent=1 // pred_check
      _
    $region19: #{tpu_custom_call.1} parent=1 // pred_check_branch
      %65 = sbr.rel (0) target = $region21
    $region20: #{tpu_custom_call.1} parent=1 // pred_region
      %67 = vsyncadd [#allocation9], 0
      %s69 = sshll.u32 %s4, 4
      %s70 = int_to_ptr.hbm [resolvable:$true] %s69
      %s71 = sshll.u32 [#allocation10], 4
      %s72 = int_to_ptr.vmem [resolvable:$true] %s71
      %74 = dma.hbm_to_vmem [thread:$0]  %s70, 64, %s72, [#allocation9]
    $region21: #{tpu_custom_call.1} parent=1 // pred_fallthru
      _
    // Predicated region
    $region22: #{tpu_custom_call.1} parent=1 // pred_check
      _
    $region23: #{tpu_custom_call.1} parent=1 // pred_check_branch
      %76 = sbr.rel (0) target = $region25
    $region24: #{tpu_custom_call.1} parent=1 // pred_region
      %78 = dma.done [#allocation3], 128
    $region25: #{tpu_custom_call.1} parent=1 // pred_fallthru
      _
    // Predicated region
    $region26: #{tpu_custom_call.1} parent=1 // pred_check
      _
    $region27: #{tpu_custom_call.1} parent=1 // pred_check_branch
      %80 = sbr.rel (0) target = $region29
    $region28: #{tpu_custom_call.1} parent=1 // pred_region
      %82 = dma.done [#allocation6], 128
    $region29: #{tpu_custom_call.1} parent=1 // pred_fallthru
      _
    // Predicated region
    $region30: #{tpu_custom_call.1} parent=1 // pred_check
      _
    $region31: #{tpu_custom_call.1} parent=1 // pred_check_branch
      %84 = sbr.rel (0) target = $region33
    $region32: #{tpu_custom_call.1} parent=1 // pred_region
      %86 = dma.done [#allocation6], 384
    $region33: #{tpu_custom_call.1} parent=1 // pred_fallthru
      _
    // Predicated region
    $region34: #{tpu_custom_call.1} parent=1 // pred_check
      _
    $region35: #{tpu_custom_call.1} parent=1 // pred_check_branch
      %88 = sbr.rel (0) target = $region37
    $region36: #{tpu_custom_call.1} parent=1 // pred_region
      %90 = dma.done [#allocation9], 640
    $region37: #{tpu_custom_call.1} parent=1 // pred_fallthru
      _
    // Predicated region
    $region38: #{tpu_custom_call.1} parent=1 // pred_check
      _
    $region39: #{tpu_custom_call.1} parent=1 // pred_check_branch
      %92 = sbr.rel (0) target = $region41
    $region40: #{tpu_custom_call.1} parent=1 // pred_region
      %94 = dma.done [#allocation9], 64
    $region41: #{tpu_custom_call.1} parent=1 // pred_fallthru
      _
    %v95 = vld [vmem:[#allocation2] sm:$0xff]
    %v96 = vld [vmem:[#allocation7] sm:$0xff]
    %v97 = vld [vmem:[#allocation7 + $0x8] sm:$0xff]
    %v98 = vld [vmem:[#allocation7 + $0x10] sm:$0x1]
    %v99 = vmul.f32 %v96, 1.442695
    %v100 = vpow.pop %v99
    %v101 = vmul.f32 %v97, 1.442695
    %v102 = vpow.pop %v101
    %v103 = vmul.f32 %v98, 1.442695
    %v104 = vpow.pop %v103
    %v105 = vadd.f32 %v100, 1.0
    %v106 = vadd.f32 %v102, 1.0
    %v107 = vadd.f32 %v104, 1.0
    %v108 = vlog2.pop %v105
    %v109 = vmul.f32 %v108, 0.6931472
    %v110 = vlog2.pop %v106
    %v111 = vmul.f32 %v110, 0.6931472
    %v112 = vlog2.pop %v107
    %v113 = vmul.f32 %v112, 0.6931472
    %v114 = vmul.f32 %v105, %v105
    %v115 = vmul.f32 %v106, %v106
    %v116 = vmul.f32 %v107, %v107
    %v117 = vmul.f32 %v114, %v114
    %v118 = vmul.f32 %v115, %v115
    %v119 = vmul.f32 %v116, %v116
    %v120 = vmul.f32 %v117, %v117
    %v121 = vmul.f32 %v118, %v118
    %v122 = vmul.f32 %v119, %v119
    %v123 = vmul.f32 %v120, %v114
    %v124 = vmul.f32 %v121, %v115
    %v125 = vmul.f32 %v122, %v116
    %v126 = vmul.f32 %v109, 10.0
    %v127 = vmul.f32 %v111, 10.0
    %v128 = vmul.f32 %v113, 10.0
    %vm129 = vcmp.gt.f32.partialorder %v126, 20.0
    %vm130 = vcmp.gt.f32.partialorder %v127, 20.0
    %vm131 = vcmp.gt.f32.partialorder %v128, 20.0
    %v132 = vadd.f32 %v123, 1.0
    %v133 = vadd.f32 %v124, 1.0
    %v134 = vadd.f32 %v125, 1.0
    %v135 = vlog2.pop %v132
    %v136 = vmul.f32 %v135, 0.6931472
    %v137 = vlog2.pop %v133
    %v138 = vmul.f32 %v137, 0.6931472
    %v139 = vlog2.pop %v134
    %v140 = vmul.f32 %v139, 0.6931472
    %v141 = vrcp.pop 10.0
    %v142 = vmul.f32 10.0, %v141
    %v143 = vsub.f32 1.0, %v142
    %v144 = vmul.f32 %v141, %v143
    %v145 = vadd.f32 %v141, %v144
    %vm146 = vweird.f32 %v141
    %v147 = vsel %vm146, %v141, %v145
    %v148 = vmul.f32 %v136, %v147
    %v149 = vmul.f32 %v138, %v147
    %v150 = vmul.f32 %v140, %v147
    %v151 = vsel %vm129, %v109, %v148
    %v152 = vsel %vm130, %v111, %v149
    %v153 = vsel %vm131, %v113, %v150
    %157 = vrot.lane.b32.xlu0 %v96, 96
    %v158 = vpop.permute.xlu0 %157
    %159 = vrot.lane.b32.xlu0 %v97, 96
    %v160 = vpop.permute.xlu0 %159
    %161 = vrot.lane.b32.xlu0 %v98, 96
    %v162 = vpop.permute.xlu0 %161
    %v166 = vmul.f32 %v151, %v158
    %v167 = vmul.f32 %v152, %v160
    %v168 = vmul.f32 %v153, %v162
    %172 = vrot.lane.b32.xlu0 %v166, 96
    %v173 = vpop.permute.xlu0 %172
    %174 = vrot.lane.b32.xlu0 %v167, 96
    %v175 = vpop.permute.xlu0 %174
    %176 = vrot.lane.b32.xlu0 %v168, 96
    %v177 = vpop.permute.xlu0 %176
    %v181 = vadd.f32 %v96, %v173
    %v182 = vadd.f32 %v97, %v175
    %v183 = vadd.f32 %v98, %v177
    %v184 = vlog2.pop %v109
    %v185 = vmul.f32 %v184, 0.6931472
    %v186 = vlog2.pop %v111
    %v187 = vmul.f32 %v186, 0.6931472
    %v188 = vlog2.pop %v113
    %v189 = vmul.f32 %v188, 0.6931472
    %v190 = vsub.f32 0.0, %v185
    %v191 = vsub.f32 0.0, %v187
    %v192 = vsub.f32 0.0, %v189
    %v193 = vmul.f32 %v109, %v109
    %v194 = vmul.f32 %v111, %v111
    %v195 = vmul.f32 %v113, %v113
    %v196 = vmul.f32 %v96, %v96
    %v197 = vmul.f32 %v97, %v97
    %v198 = vmul.f32 %v98, %v98
    %202 = vrot.lane.b32.xlu0 %v196, 32
    %v203 = vpop.permute.xlu0 %202
    %204 = vrot.lane.b32.xlu0 %v197, 32
    %v205 = vpop.permute.xlu0 %204
    %206 = vrot.lane.b32.xlu0 %v198, 32
    %v207 = vpop.permute.xlu0 %206
    %v211 = vadd.f32 %v193, %v203
    %v212 = vadd.f32 %v194, %v205
    %v213 = vadd.f32 %v195, %v207
    %v214 = vmul.f32 %v211, 0.5
    %v215 = vmul.f32 %v212, 0.5
    %v216 = vmul.f32 %v213, 0.5
    %v217 = vadd.f32 %v190, %v214
    %v218 = vadd.f32 %v191, %v215
    %v219 = vadd.f32 %v192, %v216
    %v220 = vsub.f32 %v217, 0.5
    %v221 = vsub.f32 %v218, 0.5
    %v222 = vsub.f32 %v219, 0.5
    %226 = vrot.lane.b32.xlu0 %v220, 96
    %v227 = vpop.permute.xlu0 %226
    %228 = vrot.lane.b32.xlu0 %v221, 96
    %v229 = vpop.permute.xlu0 %228
    %230 = vrot.lane.b32.xlu0 %v222, 96
    %v231 = vpop.permute.xlu0 %230
    %vm235 = vcmask 261120
    %v236 = vsel %vm235, %v227, 0.0
    %v237 = vsel %vm235, %v229, 0.0
    %v238 = vadd.f32 %v236, %v237
    %vm239 = vcmask 253952
    %v240 = vsel %vm239, %v231, 0.0
    %v241 = vadd.f32 %v238, %v240
    %242 = vadd.xlane.f32.xlu0 %v241
    %v243 = vpop.xlane.xlu0 %242
    %v244 = vrot.slane %v243, 4
    %v245 = vadd.f32 %v243, %v244
    %v246 = vrot.slane %v245, 2
    %v247 = vadd.f32 %v245, %v246
    %v248 = vrot.slane %v247, 1
    %v249 = vadd.f32 %v247, %v248
    %s250 = vtos %v249
    %s251 = sadd.f32 %s250, 0.0
    %v252 = vperm.slane %v183, 0
    %vm253 = vcmask 130048
    %v255 = vsel %vm253, %v95, 0
    %257 = vmatpush.msra.mxu0 0.0
    %258 = vmatpush.msra.mxu0 0.0
    %259 = vmatpush.msra.mxu0 0.0
    %260 = vmatpush.msra.mxu0 0.0
    %261 = vmatpush.msra.mxu0 0.0
    %262 = vmatpush.msra.mxu0 0.0
    %263 = vmatpush.msra.mxu0 0.0
    %264 = vmatpush.msra.mxu0 0.0
    %265 = vmatpush.msra.mxu0 0.0
    %266 = vmatpush.msra.mxu0 0.0
    %267 = vmatpush.msra.mxu0 0.0
    %268 = vmatpush.msra.mxu0 0.0
    %269 = vmatpush.msra.mxu0 0.0
    %270 = vmatpush.msra.mxu0 0.0
    %271 = vmatpush.msra.mxu0 %v182
    %272 = vmatpush.msra.mxu0 %v181
    %273 = vmatmul.f32.gmra.mxu0 %v255
    %v274 = vpop.f32.mrf.mxu0
    %v275 = vadd.f32 %v252, %v274
    %276 = vdwg.mxu0
    %v277 = vld [vmem:[#allocation5] sm:$0xff]
    %v278 = vadd.f32 %v277, 1e-08
    %v279 = vlog2.pop %v278
    %v280 = vmul.f32 %v279, 0.6931472
    %v281 = vsub.f32 0.0, %v280
    %v282 = vadd.f32 %v281, 1e-08
    %v283 = vlog2.pop %v282
    %v284 = vmul.f32 %v283, 0.6931472
    %v285 = vsub.f32 0.0, %v284
    %v286 = vadd.f32 %v275, %v285
    %v287 = vrcp.pop 0.67
    %v288 = vmul.f32 0.67, %v287
    %v289 = vsub.f32 1.0, %v288
    %v290 = vmul.f32 %v287, %v289
    %v291 = vadd.f32 %v287, %v290
    %vm292 = vweird.f32 %v287
    %v293 = vsel %vm292, %v287, %v291
    %v294 = vmul.f32 %v286, %v293
    %296 = vrot.lane.b32.xlu0 %v294, 112
    %v297 = vpop.permute.xlu0 %296
    %299 = vrot.lane.b32.xlu0 %v294, 16
    %v300 = vpop.permute.xlu0 %299
    %v302 = vsel %vm253, %v297, %v300
    %v303 = vsub.f32 %v294, %v302
    %v304 = vand.u32 2147483647, %v303
    %v305 = vsub.f32 0.0, %v304
    %v306 = vmul.f32 %v305, 1.442695
    %v307 = vpow.pop %v306
    %vm308 = vcmp.ge.f32.partialorder %v303, 0.0
    %v309 = vadd.f32 %v307, 1.0
    %v310 = vrcp.pop %v309
    %v311 = vmul.f32 %v309, %v310
    %v312 = vsub.f32 1.0, %v311
    %v313 = vmul.f32 %v310, %v312
    %v314 = vadd.f32 %v310, %v313
    %vm315 = vweird.f32 %v309
    %vm316 = vweird.f32 %v310
    %vm317 = vmor %vm315, %vm316
    %v318 = vsel %vm317, %v310, %v314
    %v319 = vand.u32 2147483647, %v309
    %vm320 = vcmp.eq.f32.partialorder %v319, 8.507059e+37
    %v321 = vand.u32 %v309, 2147483648
    %v322 = vor.u32 1.1754944e-38, %v321
    %v323 = vsel %vm320, %v322, %v318
    %v324 = vmul.f32 1.0, %v323
    %v325 = vmul.f32 %v307, %v323
    %v326 = vsel %vm308, %v324, %v325
    %328 = vrot.lane.b32.xlu0 %v275, 112
    %v329 = vpop.permute.xlu0 %328
    %331 = vrot.lane.b32.xlu0 %v275, 16
    %v332 = vpop.permute.xlu0 %331
    %v334 = vsel %vm253, %v329, %v332
    %v335 = vsub.f32 %v275, %v334
    %v336 = vand.u32 2147483647, %v335
    %v337 = vsub.f32 0.0, %v336
    %v338 = vmul.f32 %v337, 1.442695
    %v339 = vpow.pop %v338
    %vm340 = vcmp.ge.f32.partialorder %v335, 0.0
    %v341 = vadd.f32 %v339, 1.0
    %v342 = vrcp.pop %v341
    %v343 = vmul.f32 %v341, %v342
    %v344 = vsub.f32 1.0, %v343
    %v345 = vmul.f32 %v342, %v344
    %v346 = vadd.f32 %v342, %v345
    %vm347 = vweird.f32 %v341
    %vm348 = vweird.f32 %v342
    %vm349 = vmor %vm347, %vm348
    %v350 = vsel %vm349, %v342, %v346
    %v351 = vand.u32 2147483647, %v341
    %vm352 = vcmp.eq.f32.partialorder %v351, 8.507059e+37
    %v353 = vand.u32 %v341, 2147483648
    %v354 = vor.u32 1.1754944e-38, %v353
    %v355 = vsel %vm352, %v354, %v350
    %v356 = vmul.f32 1.0, %v355
    %v357 = vmul.f32 %v339, %v355
    %v358 = vsel %vm340, %v356, %v357
    %v359 = vadd.f32 %v358, 1e-08
    %v360 = vlog2.pop %v359
    %v361 = vmul.f32 %v360, 0.6931472
    %v362 = vsub.f32 %v361, -0.6931472
    %v363 = vmul.f32 %v358, %v362
    %v364 = vsel %vm235, %v363, 0.0
    %365 = vadd.xlane.f32.xlu0 %v364
    %v366 = vpop.xlane.xlu0 %365
    %v367 = vrot.slane %v366, 4
    %v368 = vadd.f32 %v366, %v367
    %v369 = vrot.slane %v368, 2
    %v370 = vadd.f32 %v368, %v369
    %v371 = vrot.slane %v370, 1
    %v372 = vadd.f32 %v370, %v371
    %s373 = vtos %v372
    %v374 = vrcp.pop 16000.0
    %v375 = vmul.f32 16000.0, %v374
    %v376 = vsub.f32 1.0, %v375
    %v377 = vmul.f32 %v374, %v376
    %v378 = vadd.f32 %v374, %v377
    %vm379 = vweird.f32 %v374
    %v380 = vsel %vm379, %v374, %v378
    %s381 = vtos %v380
    %s382 = smul.f32 %s373, %s381
    %s383 = sadd.f32 %s251, %s382
    %v384 = vmul.f32 %v275, %v326
    %v385 = vld [vmem:[#allocation8] sm:$0xff]
    %v386 = vld [vmem:[#allocation8 + $0x8] sm:$0xff]
    %v387 = vld [vmem:[#allocation8 + $0x10] sm:$0xff]
    %v388 = vld [vmem:[#allocation8 + $0x18] sm:$0xff]
    %v389 = vld [vmem:[#allocation8 + $0x20] sm:$0x1]
    %v390 = vmul.f32 %v385, 1.442695
    %v391 = vpow.pop %v390
    %v392 = vmul.f32 %v386, 1.442695
    %v393 = vpow.pop %v392
    %v394 = vmul.f32 %v387, 1.442695
    %v395 = vpow.pop %v394
    %v396 = vmul.f32 %v388, 1.442695
    %v397 = vpow.pop %v396
    %v398 = vmul.f32 %v389, 1.442695
    %v399 = vpow.pop %v398
    %v400 = vadd.f32 %v391, 1.0
    %v401 = vadd.f32 %v393, 1.0
    %v402 = vadd.f32 %v395, 1.0
    %v403 = vadd.f32 %v397, 1.0
    %v404 = vadd.f32 %v399, 1.0
    %v405 = vlog2.pop %v400
    %v406 = vmul.f32 %v405, 0.6931472
    %v407 = vlog2.pop %v401
    %v408 = vmul.f32 %v407, 0.6931472
    %v409 = vlog2.pop %v402
    %v410 = vmul.f32 %v409, 0.6931472
    %v411 = vlog2.pop %v403
    %v412 = vmul.f32 %v411, 0.6931472
    %v413 = vlog2.pop %v404
    %v414 = vmul.f32 %v413, 0.6931472
    %v415 = vmul.f32 %v400, %v400
    %v416 = vmul.f32 %v401, %v401
    %v417 = vmul.f32 %v402, %v402
    %v418 = vmul.f32 %v403, %v403
    %v419 = vmul.f32 %v404, %v404
    %v420 = vmul.f32 %v415, %v415
    %v421 = vmul.f32 %v416, %v416
    %v422 = vmul.f32 %v417, %v417
    %v423 = vmul.f32 %v418, %v418
    %v424 = vmul.f32 %v419, %v419
    %v425 = vmul.f32 %v420, %v420
    %v426 = vmul.f32 %v421, %v421
    %v427 = vmul.f32 %v422, %v422
    %v428 = vmul.f32 %v423, %v423
    %v429 = vmul.f32 %v424, %v424
    %v430 = vmul.f32 %v425, %v415
    %v431 = vmul.f32 %v426, %v416
    %v432 = vmul.f32 %v427, %v417
    %v433 = vmul.f32 %v428, %v418
    %v434 = vmul.f32 %v429, %v419
    %v435 = vmul.f32 %v406, 10.0
    %v436 = vmul.f32 %v408, 10.0
    %v437 = vmul.f32 %v410, 10.0
    %v438 = vmul.f32 %v412, 10.0
    %v439 = vmul.f32 %v414, 10.0
    %vm440 = vcmp.gt.f32.partialorder %v435, 20.0
    %vm441 = vcmp.gt.f32.partialorder %v436, 20.0
    %vm442 = vcmp.gt.f32.partialorder %v437, 20.0
    %vm443 = vcmp.gt.f32.partialorder %v438, 20.0
    %vm444 = vcmp.gt.f32.partialorder %v439, 20.0
    %v445 = vadd.f32 %v430, 1.0
    %v446 = vadd.f32 %v431, 1.0
    %v447 = vadd.f32 %v432, 1.0
    %v448 = vadd.f32 %v433, 1.0
    %v449 = vadd.f32 %v434, 1.0
    %v450 = vlog2.pop %v445
    %v451 = vmul.f32 %v450, 0.6931472
    %v452 = vlog2.pop %v446
    %v453 = vmul.f32 %v452, 0.6931472
    %v454 = vlog2.pop %v447
    %v455 = vmul.f32 %v454, 0.6931472
    %v456 = vlog2.pop %v448
    %v457 = vmul.f32 %v456, 0.6931472
    %v458 = vlog2.pop %v449
    %v459 = vmul.f32 %v458, 0.6931472
    %v460 = vmul.f32 %v451, %v147
    %v461 = vmul.f32 %v453, %v147
    %v462 = vmul.f32 %v455, %v147
    %v463 = vmul.f32 %v457, %v147
    %v464 = vmul.f32 %v459, %v147
    %v465 = vsel %vm440, %v406, %v460
    %v466 = vsel %vm441, %v408, %v461
    %v467 = vsel %vm442, %v410, %v462
    %v468 = vsel %vm443, %v412, %v463
    %v469 = vsel %vm444, %v414, %v464
    %475 = vrot.lane.b32.xlu0 %v385, 96
    %v476 = vpop.permute.xlu0 %475
    %477 = vrot.lane.b32.xlu0 %v386, 96
    %v478 = vpop.permute.xlu0 %477
    %479 = vrot.lane.b32.xlu0 %v387, 96
    %v480 = vpop.permute.xlu0 %479
    %481 = vrot.lane.b32.xlu0 %v388, 96
    %v482 = vpop.permute.xlu0 %481
    %483 = vrot.lane.b32.xlu0 %v389, 96
    %v484 = vpop.permute.xlu0 %483
    %v490 = vmul.f32 %v465, %v476
    %v491 = vmul.f32 %v466, %v478
    %v492 = vmul.f32 %v467, %v480
    %v493 = vmul.f32 %v468, %v482
    %v494 = vmul.f32 %v469, %v484
    %500 = vrot.lane.b32.xlu0 %v490, 96
    %v501 = vpop.permute.xlu0 %500
    %502 = vrot.lane.b32.xlu0 %v491, 96
    %v503 = vpop.permute.xlu0 %502
    %504 = vrot.lane.b32.xlu0 %v492, 96
    %v505 = vpop.permute.xlu0 %504
    %506 = vrot.lane.b32.xlu0 %v493, 96
    %v507 = vpop.permute.xlu0 %506
    %508 = vrot.lane.b32.xlu0 %v494, 96
    %v509 = vpop.permute.xlu0 %508
    %v515 = vadd.f32 %v385, %v501
    %v516 = vadd.f32 %v386, %v503
    %v517 = vadd.f32 %v387, %v505
    %v518 = vadd.f32 %v388, %v507
    %v519 = vadd.f32 %v389, %v509
    %v520 = vlog2.pop %v406
    %v521 = vmul.f32 %v520, 0.6931472
    %v522 = vlog2.pop %v408
    %v523 = vmul.f32 %v522, 0.6931472
    %v524 = vlog2.pop %v410
    %v525 = vmul.f32 %v524, 0.6931472
    %v526 = vlog2.pop %v412
    %v527 = vmul.f32 %v526, 0.6931472
    %v528 = vlog2.pop %v414
    %v529 = vmul.f32 %v528, 0.6931472
    %v530 = vsub.f32 0.0, %v521
    %v531 = vsub.f32 0.0, %v523
    %v532 = vsub.f32 0.0, %v525
    %v533 = vsub.f32 0.0, %v527
    %v534 = vsub.f32 0.0, %v529
    %v535 = vmul.f32 %v406, %v406
    %v536 = vmul.f32 %v408, %v408
    %v537 = vmul.f32 %v410, %v410
    %v538 = vmul.f32 %v412, %v412
    %v539 = vmul.f32 %v414, %v414
    %v540 = vmul.f32 %v385, %v385
    %v541 = vmul.f32 %v386, %v386
    %v542 = vmul.f32 %v387, %v387
    %v543 = vmul.f32 %v388, %v388
    %v544 = vmul.f32 %v389, %v389
    %550 = vrot.lane.b32.xlu0 %v540, 32
    %v551 = vpop.permute.xlu0 %550
    %552 = vrot.lane.b32.xlu0 %v541, 32
    %v553 = vpop.permute.xlu0 %552
    %554 = vrot.lane.b32.xlu0 %v542, 32
    %v555 = vpop.permute.xlu0 %554
    %556 = vrot.lane.b32.xlu0 %v543, 32
    %v557 = vpop.permute.xlu0 %556
    %558 = vrot.lane.b32.xlu0 %v544, 32
    %v559 = vpop.permute.xlu0 %558
    %v565 = vadd.f32 %v535, %v551
    %v566 = vadd.f32 %v536, %v553
    %v567 = vadd.f32 %v537, %v555
    %v568 = vadd.f32 %v538, %v557
    %v569 = vadd.f32 %v539, %v559
    %v570 = vmul.f32 %v565, 0.5
    %v571 = vmul.f32 %v566, 0.5
    %v572 = vmul.f32 %v567, 0.5
    %v573 = vmul.f32 %v568, 0.5
    %v574 = vmul.f32 %v569, 0.5
    %v575 = vadd.f32 %v530, %v570
    %v576 = vadd.f32 %v531, %v571
    %v577 = vadd.f32 %v532, %v572
    %v578 = vadd.f32 %v533, %v573
    %v579 = vadd.f32 %v534, %v574
    %v580 = vsub.f32 %v575, 0.5
    %v581 = vsub.f32 %v576, 0.5
    %v582 = vsub.f32 %v577, 0.5
    %v583 = vsub.f32 %v578, 0.5
    %v584 = vsub.f32 %v579, 0.5
    %590 = vrot.lane.b32.xlu0 %v580, 96
    %v591 = vpop.permute.xlu0 %590
    %592 = vrot.lane.b32.xlu0 %v581, 96
    %v593 = vpop.permute.xlu0 %592
    %594 = vrot.lane.b32.xlu0 %v582, 96
    %v595 = vpop.permute.xlu0 %594
    %596 = vrot.lane.b32.xlu0 %v583, 96
    %v597 = vpop.permute.xlu0 %596
    %598 = vrot.lane.b32.xlu0 %v584, 96
    %v599 = vpop.permute.xlu0 %598
    %v605 = vsel %vm235, %v591, 0.0
    %v606 = vsel %vm235, %v593, 0.0
    %v607 = vadd.f32 %v605, %v606
    %v608 = vsel %vm235, %v595, 0.0
    %v609 = vadd.f32 %v607, %v608
    %v610 = vsel %vm235, %v597, 0.0
    %v611 = vadd.f32 %v609, %v610
    %v612 = vsel %vm239, %v599, 0.0
    %v613 = vadd.f32 %v611, %v612
    %614 = vadd.xlane.f32.xlu0 %v613
    %v615 = vpop.xlane.xlu0 %614
    %v616 = vrot.slane %v615, 4
    %v617 = vadd.f32 %v615, %v616
    %v618 = vrot.slane %v617, 2
    %v619 = vadd.f32 %v617, %v618
    %v620 = vrot.slane %v619, 1
    %v621 = vadd.f32 %v619, %v620
    %s622 = vtos %v621
    %s623 = sadd.f32 %s383, %s622
    %624 = vrot.lane.b32.xlu0 %v385, 32
    %v625 = vpop.permute.xlu0 %624
    %626 = vrot.lane.b32.xlu0 %v386, 32
    %v627 = vpop.permute.xlu0 %626
    %628 = vrot.lane.b32.xlu0 %v387, 32
    %v629 = vpop.permute.xlu0 %628
    %630 = vrot.lane.b32.xlu0 %v388, 32
    %v631 = vpop.permute.xlu0 %630
    %632 = vrot.lane.b32.xlu0 %v389, 32
    %v633 = vpop.permute.xlu0 %632
    %v639 = vsel %vm235, %v515, %v625
    %v640 = vsel %vm235, %v516, %v627
    %v641 = vsel %vm235, %v517, %v629
    %v642 = vsel %vm235, %v518, %v631
    %v643 = vsel %vm235, %v519, %v633
    %v644 = vperm.slane %v643, 0
    %v646 = vsel %vm235, %v384, 0
    %648 = vmatpush.msra.mxu0 0.0
    %649 = vmatpush.msra.mxu0 0.0
    %650 = vmatpush.msra.mxu0 0.0
    %651 = vmatpush.msra.mxu0 0.0
    %652 = vmatpush.msra.mxu0 0.0
    %653 = vmatpush.msra.mxu0 0.0
    %654 = vmatpush.msra.mxu0 0.0
    %655 = vmatpush.msra.mxu0 0.0
    %656 = vmatpush.msra.mxu0 0.0
    %657 = vmatpush.msra.mxu0 0.0
    %658 = vmatpush.msra.mxu0 0.0
    %659 = vmatpush.msra.mxu0 0.0
    %660 = vmatpush.msra.mxu0 %v642
    %661 = vmatpush.msra.mxu0 %v641
    %662 = vmatpush.msra.mxu0 %v640
    %663 = vmatpush.msra.mxu0 %v639
    %664 = vmatmul.f32.gmra.mxu0 %v646
    %v665 = vpop.f32.mrf.mxu0
    %v666 = vadd.f32 %v644, %v665
    %667 = vdwg.mxu0
    %669 = vrot.lane.b32.xlu0 %v285, 96
    %v670 = vpop.permute.xlu0 %669
    %v672 = vadd.f32 %v666, %v670
    %v673 = vmul.f32 %v672, %v293
    %675 = vrot.lane.b32.xlu0 %v673, 112
    %v676 = vpop.permute.xlu0 %675
    %678 = vrot.lane.b32.xlu0 %v673, 16
    %v679 = vpop.permute.xlu0 %678
    %v681 = vsel %vm253, %v676, %v679
    %v682 = vsub.f32 %v673, %v681
    %v683 = vand.u32 2147483647, %v682
    %v684 = vsub.f32 0.0, %v683
    %v685 = vmul.f32 %v684, 1.442695
    %v686 = vpow.pop %v685
    %vm687 = vcmp.ge.f32.partialorder %v682, 0.0
    %v688 = vadd.f32 %v686, 1.0
    %v689 = vrcp.pop %v688
    %v690 = vmul.f32 %v688, %v689
    %v691 = vsub.f32 1.0, %v690
    %v692 = vmul.f32 %v689, %v691
    %v693 = vadd.f32 %v689, %v692
    %vm694 = vweird.f32 %v688
    %vm695 = vweird.f32 %v689
    %vm696 = vmor %vm694, %vm695
    %v697 = vsel %vm696, %v689, %v693
    %v698 = vand.u32 2147483647, %v688
    %vm699 = vcmp.eq.f32.partialorder %v698, 8.507059e+37
    %v700 = vand.u32 %v688, 2147483648
    %v701 = vor.u32 1.1754944e-38, %v700
    %v702 = vsel %vm699, %v701, %v697
    %v703 = vmul.f32 1.0, %v702
    %v704 = vmul.f32 %v686, %v702
    %v705 = vsel %vm687, %v703, %v704
    %707 = vrot.lane.b32.xlu0 %v666, 112
    %v708 = vpop.permute.xlu0 %707
    %710 = vrot.lane.b32.xlu0 %v666, 16
    %v711 = vpop.permute.xlu0 %710
    %v713 = vsel %vm253, %v708, %v711
    %v714 = vsub.f32 %v666, %v713
    %v715 = vand.u32 2147483647, %v714
    %v716 = vsub.f32 0.0, %v715
    %v717 = vmul.f32 %v716, 1.442695
    %v718 = vpow.pop %v717
    %vm719 = vcmp.ge.f32.partialorder %v714, 0.0
    %v720 = vadd.f32 %v718, 1.0
    %v721 = vrcp.pop %v720
    %v722 = vmul.f32 %v720, %v721
    %v723 = vsub.f32 1.0, %v722
    %v724 = vmul.f32 %v721, %v723
    %v725 = vadd.f32 %v721, %v724
    %vm726 = vweird.f32 %v720
    %vm727 = vweird.f32 %v721
    %vm728 = vmor %vm726, %vm727
    %v729 = vsel %vm728, %v721, %v725
    %v730 = vand.u32 2147483647, %v720
    %vm731 = vcmp.eq.f32.partialorder %v730, 8.507059e+37
    %v732 = vand.u32 %v720, 2147483648
    %v733 = vor.u32 1.1754944e-38, %v732
    %v734 = vsel %vm731, %v733, %v729
    %v735 = vmul.f32 1.0, %v734
    %v736 = vmul.f32 %v718, %v734
    %v737 = vsel %vm719, %v735, %v736
    %v738 = vadd.f32 %v737, 1e-08
    %v739 = vlog2.pop %v738
    %v740 = vmul.f32 %v739, 0.6931472
    %v741 = vsub.f32 %v740, -0.6931472
    %v742 = vmul.f32 %v737, %v741
    %v743 = vsel %vm235, %v742, 0.0
    %744 = vadd.xlane.f32.xlu0 %v743
    %v745 = vpop.xlane.xlu0 %744
    %v746 = vrot.slane %v745, 4
    %v747 = vadd.f32 %v745, %v746
    %v748 = vrot.slane %v747, 2
    %v749 = vadd.f32 %v747, %v748
    %v750 = vrot.slane %v749, 1
    %v751 = vadd.f32 %v749, %v750
    %s752 = vtos %v751
    %v753 = vrcp.pop 16000.0
    %v754 = vmul.f32 16000.0, %v753
    %v755 = vsub.f32 1.0, %v754
    %v756 = vmul.f32 %v753, %v755
    %v757 = vadd.f32 %v753, %v756
    %vm758 = vweird.f32 %v753
    %v759 = vsel %vm758, %v753, %v757
    %s760 = vtos %v759
    %s761 = smul.f32 %s752, %s760
    %s762 = sadd.f32 %s623, %s761
    %v763 = vmul.f32 %v666, %v705
    %v764 = vmul.f32 %v391, %v391
    %v765 = vmul.f32 %v393, %v393
    %v766 = vmul.f32 %v395, %v395
    %v767 = vmul.f32 %v397, %v397
    %v768 = vmul.f32 %v399, %v399
    %v769 = vmul.f32 %v384, %v384
    %v770 = vperm.slane %v768, 0
    %775 = vrot.lane.b32.xlu0 %v764, 96
    %v776 = vpop.permute.xlu0 %775
    %777 = vrot.lane.b32.xlu0 %v765, 96
    %v778 = vpop.permute.xlu0 %777
    %779 = vrot.lane.b32.xlu0 %v766, 96
    %v780 = vpop.permute.xlu0 %779
    %781 = vrot.lane.b32.xlu0 %v767, 96
    %v782 = vpop.permute.xlu0 %781
    %788 = vrot.lane.b32.xlu0 %v770, 96
    %v789 = vpop.permute.xlu0 %788
    %v792 = vsel %vm235, %v769, 0
    %794 = vmatpush.msra.mxu0 0.0
    %795 = vmatpush.msra.mxu0 0.0
    %796 = vmatpush.msra.mxu0 0.0
    %797 = vmatpush.msra.mxu0 0.0
    %798 = vmatpush.msra.mxu0 0.0
    %799 = vmatpush.msra.mxu0 0.0
    %800 = vmatpush.msra.mxu0 0.0
    %801 = vmatpush.msra.mxu0 0.0
    %802 = vmatpush.msra.mxu0 0.0
    %803 = vmatpush.msra.mxu0 0.0
    %804 = vmatpush.msra.mxu0 0.0
    %805 = vmatpush.msra.mxu0 0.0
    %806 = vmatpush.msra.mxu0 %v782
    %807 = vmatpush.msra.mxu0 %v780
    %808 = vmatpush.msra.mxu0 %v778
    %809 = vmatpush.msra.mxu0 %v776
    %810 = vmatmul.f32.gmra.mxu0 %v792
    %v811 = vpop.f32.mrf.mxu0
    %v812 = vadd.f32 %v789, %v811
    %813 = vdwg.mxu0
    %v814 = vlog2.pop %v812
    %v815 = vmul.f32 %v814, 0.6931472
    %v816 = vmul.f32 %v815, -0.5
    %v817 = vmul.f32 %v666, %v666
    %819 = vrot.lane.b32.xlu0 %v817, 96
    %v820 = vpop.permute.xlu0 %819
    %v822 = vadd.f32 %v812, %v820
    %v823 = vmul.f32 %v822, 0.5
    %v824 = vadd.f32 %v816, %v823
    %v825 = vsub.f32 %v824, 0.5
    %v826 = vsel %vm235, %v825, 0.0
    %827 = vadd.xlane.f32.xlu0 %v826
    %v828 = vpop.xlane.xlu0 %827
    %v829 = vrot.slane %v828, 4
    %v830 = vadd.f32 %v828, %v829
    %v831 = vrot.slane %v830, 2
    %v832 = vadd.f32 %v830, %v831
    %v833 = vrot.slane %v832, 1
    %v834 = vadd.f32 %v832, %v833
    %s835 = vtos %v834
    %v836 = vrcp.pop 256.0
    %v837 = vmul.f32 256.0, %v836
    %v838 = vsub.f32 1.0, %v837
    %v839 = vmul.f32 %v836, %v838
    %v840 = vadd.f32 %v836, %v839
    %vm841 = vweird.f32 %v836
    %v842 = vsel %vm841, %v836, %v840
    %s843 = vtos %v842
    %s844 = smul.f32 %s835, %s843
    %v845 = vld [vmem:[#allocation10] sm:$0x1]
    %v846 = vld [vmem:[#allocation10 + $0x1] sm:$0x1]
    %v847 = vld [vmem:[#allocation10 + $0x2] sm:$0x1]
    %v848 = vmul.f32 %v846, 1.442695
    %v849 = vpow.pop %v848
    %v850 = vadd.f32 %v849, 1.0
    %v851 = vlog2.pop %v850
    %v852 = vmul.f32 %v851, 0.6931472
    %v853 = vmul.f32 %v850, %v850
    %v854 = vmul.f32 %v853, %v853
    %v855 = vmul.f32 %v854, %v854
    %v856 = vmul.f32 %v855, %v853
    %v857 = vmul.f32 %v852, 10.0
    %vm858 = vcmp.gt.f32.partialorder %v857, 20.0
    %v859 = vadd.f32 %v856, 1.0
    %v860 = vlog2.pop %v859
    %v861 = vmul.f32 %v860, 0.6931472
    %v862 = vmul.f32 %v861, %v147
    %v863 = vsel %vm858, %v852, %v862
    %v864 = vmul.f32 %v863, %v847
    %v865 = vadd.f32 %v845, %v864
    %v866 = vlog2.pop %v852
    %v867 = vmul.f32 %v866, 0.6931472
    %v868 = vsub.f32 0.0, %v867
    %v869 = vmul.f32 %v852, %v852
    %v870 = vmul.f32 %v845, %v845
    %v871 = vadd.f32 %v869, %v870
    %v872 = vmul.f32 %v871, 0.5
    %v873 = vadd.f32 %v868, %v872
    %v874 = vsub.f32 %v873, 0.5
    %vm875 = vcmask 270336
    %v876 = vsel %vm875, %v874, 0.0
    %877 = vadd.xlane.f32.xlu0 %v876
    %v878 = vpop.xlane.xlu0 %877
    %v879 = vrot.slane %v878, 4
    %v880 = vadd.f32 %v878, %v879
    %v881 = vrot.slane %v880, 2
    %v882 = vadd.f32 %v880, %v881
    %v883 = vrot.slane %v882, 1
    %v884 = vadd.f32 %v882, %v883
    %s885 = vtos %v884
    %s886 = sadd.f32 %s762, %s885
    %v887 = vmul.f32 %v865, %v865
    %v888 = vperm.slane %v887, 0
    %v889 = vmul.f32 %v763, %v888
    %v890 = vsel %vm235, %v889, 0.0
    %891 = vadd.xlane.f32.xlu0 %v890
    %v892 = vpop.xlane.xlu0 %891
    %894 = vrot.lane.b32.xlu0 %v888, 112
    %v895 = vpop.permute.xlu0 %894
    %v897 = vmul.f32 %v95, %v895
    %v898 = vadd.f32 %v892, %v897
    %899 = vrot.lane.b32.xlu0 %v888, 111
    %v900 = vpop.permute.xlu0 %899
    %v902 = vadd.f32 %v898, %v900
    %v903 = vand.u32 2147483647, %v902
    %v904 = vsub.f32 0.0, %v903
    %v905 = vmul.f32 %v904, 1.442695
    %v906 = vpow.pop %v905
    %vm907 = vcmp.ge.f32.partialorder %v902, 0.0
    %v908 = vadd.f32 %v906, 1.0
    %v909 = vrcp.pop %v908
    %v910 = vmul.f32 %v908, %v909
    %v911 = vsub.f32 1.0, %v910
    %v912 = vmul.f32 %v909, %v911
    %v913 = vadd.f32 %v909, %v912
    %vm914 = vweird.f32 %v908
    %vm915 = vweird.f32 %v909
    %vm916 = vmor %vm914, %vm915
    %v917 = vsel %vm916, %v909, %v913
    %v918 = vand.u32 2147483647, %v908
    %vm919 = vcmp.eq.f32.partialorder %v918, 8.507059e+37
    %v920 = vand.u32 %v908, 2147483648
    %v921 = vor.u32 1.1754944e-38, %v920
    %v922 = vsel %vm919, %v921, %v917
    %v923 = vmul.f32 1.0, %v922
    %v924 = vmul.f32 %v906, %v922
    %v925 = vsel %vm907, %v923, %v924
    %v926 = vmul.f32 %v95, %v925
    %v927 = vsub.f32 0.0, %v926
    %929 = vrot.lane.b32.xlu0 %v927, 112
    %v930 = vpop.permute.xlu0 %929
    %vm932 = vcmask 7168
    %933 = vst.msk [vmem:[%s5] sm:$0xff] %vm932, %v930
    %s934 = scalar_lea.smem [#allocation11], 0
    %935 = sst [smem:[%s934]] %s886
    %s936 = scalar_lea.smem [#allocation11], 1
    %937 = sst [smem:[%s936]] %s844
    // Predicated region
    $region42: #{tpu_custom_call.1} parent=1 // pred_check
      _
    $region43: #{tpu_custom_call.1} parent=1 // pred_check_branch
      %939 = sbr.rel (0) target = $region45
    $region44: #{tpu_custom_call.1} parent=1 // pred_region
      _
    $region45: #{tpu_custom_call.1} parent=1 // pred_fallthru
      _
    // Predicated region
    $region46: #{tpu_custom_call.1} parent=1 // pred_check
      _
    $region47: #{tpu_custom_call.1} parent=1 // pred_check_branch
      %941 = sbr.rel (0) target = $region49
    $region48: #{tpu_custom_call.1} parent=1 // pred_region
      %943 = vsyncadd [#allocation4], 0
      %s945 = sshll.u32 %s6, 4
      %s946 = int_to_ptr.hbm [resolvable:$true] %s945
      %948 = dma.smem_to_hbm [#allocation11], 16, %s946, [#allocation4]
    $region49: #{tpu_custom_call.1} parent=1 // pred_fallthru
      _
    // Predicated region
    $region50: #{tpu_custom_call.1} parent=1 // pred_check
      _
    $region51: #{tpu_custom_call.1} parent=1 // pred_check_branch
      %950 = sbr.rel (0) target = $region53
    $region52: #{tpu_custom_call.1} parent=1 // pred_region
      _
    $region53: #{tpu_custom_call.1} parent=1 // pred_fallthru
      _
    // Predicated region
    $region54: #{tpu_custom_call.1} parent=1 // pred_check
      _
    $region55: #{tpu_custom_call.1} parent=1 // pred_check_branch
      %952 = sbr.rel (0) target = $region57
    $region56: #{tpu_custom_call.1} parent=1 // pred_region
      %954 = dma.done [#allocation4], 16
    $region57: #{tpu_custom_call.1} parent=1 // pred_fallthru
      _
    %955 = sfence
    %956 = vsyncpa [#allocation3], 1
    %957 = vsyncpa [#allocation6], 1
    %958 = vsyncpa [#allocation9], 1
    %959 = vsyncpa [#allocation4], 1

</llo_original>
